<compile_context>
chip_gen: v6e
topology: v6e:2x2x1
jax: 0.10.0
libtpu: 0.0.40
codegen_flags: <defaults>
</compile_context>

<pallas_src>
import jax
import jax.numpy as jnp
from jax.experimental import pallas as pl
from jax.experimental.pallas import tpu as pltpu

IN_DIM = 64                     # logical input width (PyTorch Linear(64, 128))
IN_PAD = 128                    # zero-padded contraction dim: full 128-lane vreg
H1, H2, H3 = 128, 256, 512
OUT_DIM = 1 * 28 * 28           # 784 (= full output width; no column padding)


def _round_up(x, m):
    return -(-x // m) * m


def decoder_kernel(x_ref, w1_ref, b1_ref, w2_ref, b2_ref, w3_ref, w4_ref, o_ref):
    # All four matmuls + activations fused.  Weights/biases are resident across
    # the whole grid (constant index_maps); only the x / out tiles stream.
    h = jnp.dot(x_ref[...], w1_ref[...], preferred_element_type=jnp.float32)
    h = jnp.maximum(h + b1_ref[...], 0.0)
    h = jnp.dot(h.astype(jnp.bfloat16), w2_ref[...],
                preferred_element_type=jnp.float32)
    h = jnp.maximum(h + b2_ref[...], 0.0)
    h = jnp.dot(h.astype(jnp.bfloat16), w3_ref[...],
                preferred_element_type=jnp.float32)
    h = jnp.maximum(h, 0.0)
    y = jnp.dot(h.astype(jnp.bfloat16), w4_ref[...],
                preferred_element_type=jnp.float32)
    # sigmoid(y) == 0.5 * (tanh(0.5 * y) + 1): single EUP op per element
    # (vs. exp + divide), keeping the EUP slot off the critical path.
    o_ref[...] = (0.5 * (jnp.tanh(0.5 * y) + 1.0)).astype(o_ref.dtype)


def decoder_forward(x, params, *, tile_b=512):
    """x: (B, 64) float32 -> (B, 1, 28, 28) float32.

    params: output of prepare_params() — bf16 weights (W1 row-padded to IN_PAD),
    f32 (1, H) biases.
    """
    w1, b1, w2, b2, w3, w4 = params
    B = x.shape[0]

    # Batch tiling: multiple of 8 (sublane); aim for large tiles but keep the
    # grid at >= 2 steps when the batch allows it (v7x has 2 TensorCores and a
    # 1-step grid would leave one idle).  Pad the batch to a whole tile count.
    pad_b = _round_up(B, 8)
    tb = min(tile_b, max(8, _round_up(pad_b // 2, 8)))
    pad_b = _round_up(pad_b, tb)
    grid = (pad_b // tb,)

    # Cast to bf16 and zero-pad: batch rows to pad_b, columns 64 -> 128.
    x_bf16 = x.astype(jnp.bfloat16)
    x_bf16 = jnp.pad(x_bf16, ((0, pad_b - B), (0, IN_PAD - IN_DIM)))

    out2d = pl.pallas_call(
        decoder_kernel,
        out_shape=jax.ShapeDtypeStruct((pad_b, OUT_DIM), jnp.float32),
        grid_spec=pltpu.PrefetchScalarGridSpec(
            num_scalar_prefetch=0,
            grid=grid,
            in_specs=[
                pl.BlockSpec((tb, IN_PAD), lambda i: (i, 0)),    # x tile (bf16)
                pl.BlockSpec((IN_PAD, H1), lambda i: (0, 0)),    # W1 (resident)
                pl.BlockSpec((1, H1), lambda i: (0, 0)),         # b1 (f32)
                pl.BlockSpec((H1, H2), lambda i: (0, 0)),        # W2
                pl.BlockSpec((1, H2), lambda i: (0, 0)),         # b2 (f32)
                pl.BlockSpec((H2, H3), lambda i: (0, 0)),        # W3
                pl.BlockSpec((H3, OUT_DIM), lambda i: (0, 0)),   # W4 (full width)
            ],
            # Block width 784 equals the full array width -> legal, and avoids
            # any trailing-column slice in the wrapper.
            out_specs=pl.BlockSpec((tb, OUT_DIM), lambda i: (i, 0)),
        ),
        compiler_params=pltpu.CompilerParams(
            dimension_semantics=("parallel",),
            vmem_limit_bytes=32 * 1024 * 1024,  # v5e default scoped VMEM is 16 MiB
        ),
    )(x_bf16, w1, b1, w2, b2, w3, w4)

    # Leading-batch slice (no-op when pad_b == B) + NCHW reshape.
    return out2d[:B].reshape(B, 1, 28, 28)


def init_params(key):
    """Deterministic parameter init (shapes from the PyTorch module's __init__).

    Stored as (in, out); PyTorch stores (out, in) and computes x @ W^T.
    """
    k1, k2, k3, k4, k5, k6 = jax.random.split(key, 6)
    w1 = jax.random.normal(k1, (IN_DIM, H1), jnp.float32) * 0.05
    b1 = jax.random.normal(k2, (1, H1), jnp.float32) * 0.05
    w2 = jax.random.normal(k3, (H1, H2), jnp.float32) * 0.05
    b2 = jax.random.normal(k4, (1, H2), jnp.float32) * 0.05
    w3 = jax.random.normal(k5, (H2, H3), jnp.float32) * 0.05       # bias=False
    w4 = jax.random.normal(k6, (H3, OUT_DIM), jnp.float32) * 0.05  # bias=False
    return (w1, b1, w2, b2, w3, w4)


def prepare_params(params):
    """Cast weights to bf16 (MXU-native); zero-pad W1's rows 64 -> 128."""
    w1, b1, w2, b2, w3, w4 = params
    w1_pad = jnp.pad(w1, ((0, IN_PAD - IN_DIM), (0, 0)))  # padded rows are zero
    return (w1_pad.astype(jnp.bfloat16), b1.astype(jnp.float32),
            w2.astype(jnp.bfloat16), b2.astype(jnp.float32),
            w3.astype(jnp.bfloat16), w4.astype(jnp.bfloat16))


def decoder_reference(x, prepared_params):
    """Pure-JAX reference using the same (bf16-rounded) weights in f32 math."""
    w1, b1, w2, b2, w3, w4 = [p.astype(jnp.float32) for p in prepared_params]
    h = jax.nn.relu(x @ w1[:IN_DIM, :] + b1)   # ignore zero-padded W1 rows
    h = jax.nn.relu(h @ w2 + b2)
    h = jax.nn.relu(h @ w3)
    y = jax.nn.sigmoid(h @ w4)
    return y.reshape(x.shape[0], 1, 28, 28)


if __name__ == "__main__":
    key = jax.random.PRNGKey(0)
    kx, kp = jax.random.split(key)

    B = 8  # small test batch; wrapper pads / tiles larger batches automatically
    x = jax.random.normal(kx, (B, IN_DIM), jnp.float32)
    params = prepare_params(init_params(kp))

    out = decoder_forward(x, params)
    out = jax.block_until_ready(out)

    ref = decoder_reference(x, params)
    assert out.shape == (B, 1, 28, 28), out.shape
    # bf16 dot operands / bf16-rounded activations (f32 accumulation) vs f32
    # reference -> looser tolerance.
    assert jnp.allclose(out, ref, atol=2e-2, rtol=2e-2), float(
        jnp.max(jnp.abs(out - ref)))

    print("KERNEL_OK")
</pallas_src>

<mosaic_0001>
module attributes {stable_mosaic.version = 11 : i64} {
  func.func @decoder_kernel(%arg0: i32, %arg1: memref<8x128xbf16, #tpu.memory_space<vmem>>, %arg2: memref<128x128xbf16, #tpu.memory_space<vmem>>, %arg3: memref<1x128xf32, #tpu.memory_space<vmem>>, %arg4: memref<128x256xbf16, #tpu.memory_space<vmem>>, %arg5: memref<1x256xf32, #tpu.memory_space<vmem>>, %arg6: memref<256x512xbf16, #tpu.memory_space<vmem>>, %arg7: memref<512x784xbf16, #tpu.memory_space<vmem>>, %arg8: memref<8x784xf32, #tpu.memory_space<vmem>>) attributes {dimension_semantics = [#tpu.dimension_semantics<parallel>], iteration_bounds = array<i64: 1>, scalar_prefetch = 0 : i64, scratch_operands = 0 : i64, tpu.core_type = #tpu.core_type<tc>, window_params = [{transform_indices = @transform_0, window_bounds = array<i64: 8, 128>}, {pipeline_mode = #tpu.pipeline_mode<synchronous>, transform_indices = @transform_1, window_bounds = array<i64: 128, 128>}, {pipeline_mode = #tpu.pipeline_mode<synchronous>, transform_indices = @transform_2, window_bounds = array<i64: 1, 128>}, {pipeline_mode = #tpu.pipeline_mode<synchronous>, transform_indices = @transform_3, window_bounds = array<i64: 128, 256>}, {pipeline_mode = #tpu.pipeline_mode<synchronous>, transform_indices = @transform_4, window_bounds = array<i64: 1, 256>}, {pipeline_mode = #tpu.pipeline_mode<synchronous>, transform_indices = @transform_5, window_bounds = array<i64: 256, 512>}, {pipeline_mode = #tpu.pipeline_mode<synchronous>, transform_indices = @transform_6, window_bounds = array<i64: 512, 784>}, {transform_indices = @transform_7, window_bounds = array<i64: 8, 784>}]} {
    %c0 = arith.constant 0 : index
    %c0_0 = arith.constant 0 : index
    %0 = vector.load %arg1[%c0, %c0_0] : memref<8x128xbf16, #tpu.memory_space<vmem>>, vector<8x128xbf16>
    %c0_1 = arith.constant 0 : index
    %c0_2 = arith.constant 0 : index
    %1 = vector.load %arg2[%c0_1, %c0_2] : memref<128x128xbf16, #tpu.memory_space<vmem>>, vector<128x128xbf16>
    %cst = arith.constant dense<0.000000e+00> : vector<8x128xf32>
    %2 = tpu.matmul %0, %1, %cst {dimension_numbers = #tpu.dot_dimension_numbers<[1], [0], [0], [1], [0, 0, 1, 1], [], []>} : vector<8x128xbf16>, vector<128x128xbf16>, vector<8x128xf32> -> vector<8x128xf32>
    %c0_3 = arith.constant 0 : index
    %c0_4 = arith.constant 0 : index
    %3 = vector.load %arg3[%c0_3, %c0_4] : memref<1x128xf32, #tpu.memory_space<vmem>>, vector<1x128xf32>
    %4 = vector.broadcast %3 : vector<1x128xf32> to vector<8x128xf32>
    %5 = arith.addf %2, %4 : vector<8x128xf32>
    %cst_5 = arith.constant 0.000000e+00 : f32
    %6 = vector.broadcast %cst_5 : f32 to vector<8x128xf32>
    %7 = arith.maximumf %5, %6 : vector<8x128xf32>
    %8 = arith.truncf %7 : vector<8x128xf32> to vector<8x128xbf16>
    %c0_6 = arith.constant 0 : index
    %c0_7 = arith.constant 0 : index
    %9 = vector.load %arg4[%c0_6, %c0_7] : memref<128x256xbf16, #tpu.memory_space<vmem>>, vector<128x256xbf16>
    %cst_8 = arith.constant dense<0.000000e+00> : vector<8x256xf32>
    %10 = tpu.matmul %8, %9, %cst_8 {dimension_numbers = #tpu.dot_dimension_numbers<[1], [0], [0], [1], [0, 0, 1, 1], [], []>} : vector<8x128xbf16>, vector<128x256xbf16>, vector<8x256xf32> -> vector<8x256xf32>
    %c0_9 = arith.constant 0 : index
    %c0_10 = arith.constant 0 : index
    %11 = vector.load %arg5[%c0_9, %c0_10] : memref<1x256xf32, #tpu.memory_space<vmem>>, vector<1x256xf32>
    %12 = vector.broadcast %11 : vector<1x256xf32> to vector<8x256xf32>
    %13 = arith.addf %10, %12 : vector<8x256xf32>
    %cst_11 = arith.constant 0.000000e+00 : f32
    %14 = vector.broadcast %cst_11 : f32 to vector<8x256xf32>
    %15 = arith.maximumf %13, %14 : vector<8x256xf32>
    %16 = arith.truncf %15 : vector<8x256xf32> to vector<8x256xbf16>
    %c0_12 = arith.constant 0 : index
    %c0_13 = arith.constant 0 : index
    %17 = vector.load %arg6[%c0_12, %c0_13] : memref<256x512xbf16, #tpu.memory_space<vmem>>, vector<256x512xbf16>
    %cst_14 = arith.constant dense<0.000000e+00> : vector<8x512xf32>
    %18 = tpu.matmul %16, %17, %cst_14 {dimension_numbers = #tpu.dot_dimension_numbers<[1], [0], [0], [1], [0, 0, 1, 1], [], []>} : vector<8x256xbf16>, vector<256x512xbf16>, vector<8x512xf32> -> vector<8x512xf32>
    %cst_15 = arith.constant 0.000000e+00 : f32
    %19 = vector.broadcast %cst_15 : f32 to vector<8x512xf32>
    %20 = arith.maximumf %18, %19 : vector<8x512xf32>
    %21 = arith.truncf %20 : vector<8x512xf32> to vector<8x512xbf16>
    %c0_16 = arith.constant 0 : index
    %c0_17 = arith.constant 0 : index
    %22 = vector.load %arg7[%c0_16, %c0_17] : memref<512x784xbf16, #tpu.memory_space<vmem>>, vector<512x784xbf16>
    %cst_18 = arith.constant dense<0.000000e+00> : vector<8x784xf32>
    %23 = tpu.matmul %21, %22, %cst_18 {dimension_numbers = #tpu.dot_dimension_numbers<[1], [0], [0], [1], [0, 0, 1, 1], [], []>} : vector<8x512xbf16>, vector<512x784xbf16>, vector<8x784xf32> -> vector<8x784xf32>
    %cst_19 = arith.constant 5.000000e-01 : f32
    %24 = vector.broadcast %cst_19 : f32 to vector<8x784xf32>
    %25 = arith.mulf %24, %23 : vector<8x784xf32>
    %26 = math.tanh %25 : vector<8x784xf32>
    %cst_20 = arith.constant 1.000000e+00 : f32
    %27 = vector.broadcast %cst_20 : f32 to vector<8x784xf32>
    %28 = arith.addf %26, %27 : vector<8x784xf32>
    %cst_21 = arith.constant 5.000000e-01 : f32
    %29 = vector.broadcast %cst_21 : f32 to vector<8x784xf32>
    %30 = arith.mulf %29, %28 : vector<8x784xf32>
    %c0_22 = arith.constant 0 : index
    %c0_23 = arith.constant 0 : index
    %31 = vector.load %arg8[%c0_22, %c0_23] : memref<8x784xf32, #tpu.memory_space<vmem>>, vector<8x784xf32>
    tpu.vector_store %arg8[%c0_22, %c0_23], %30 {strides = array<i32>} : memref<8x784xf32, #tpu.memory_space<vmem>>, vector<8x784xf32>,
    return
  }
  func.func @transform_0(%arg0: i32) -> (i32, i32) {
    %c0_i32 = arith.constant 0 : i32
    %c0_i32_0 = arith.constant 0 : i32
    return %arg0, %c0_i32 : i32, i32
  }
  func.func @transform_1(%arg0: i32) -> (i32, i32) {
    %c0_i32 = arith.constant 0 : i32
    %c0_i32_0 = arith.constant 0 : i32
    %c0_i32_1 = arith.constant 0 : i32
    return %c0_i32, %c0_i32_0 : i32, i32
  }
  func.func @transform_2(%arg0: i32) -> (i32, i32) {
    %c0_i32 = arith.constant 0 : i32
    %c0_i32_0 = arith.constant 0 : i32
    %c0_i32_1 = arith.constant 0 : i32
    return %c0_i32, %c0_i32_0 : i32, i32
  }
  func.func @transform_3(%arg0: i32) -> (i32, i32) {
    %c0_i32 = arith.constant 0 : i32
    %c0_i32_0 = arith.constant 0 : i32
    %c0_i32_1 = arith.constant 0 : i32
    return %c0_i32, %c0_i32_0 : i32, i32
  }
  func.func @transform_4(%arg0: i32) -> (i32, i32) {
    %c0_i32 = arith.constant 0 : i32
    %c0_i32_0 = arith.constant 0 : i32
    %c0_i32_1 = arith.constant 0 : i32
    return %c0_i32, %c0_i32_0 : i32, i32
  }
  func.func @transform_5(%arg0: i32) -> (i32, i32) {
    %c0_i32 = arith.constant 0 : i32
    %c0_i32_0 = arith.constant 0 : i32
    %c0_i32_1 = arith.constant 0 : i32
    return %c0_i32, %c0_i32_0 : i32, i32
  }
  func.func @transform_6(%arg0: i32) -> (i32, i32) {
    %c0_i32 = arith.constant 0 : i32
    %c0_i32_0 = arith.constant 0 : i32
    %c0_i32_1 = arith.constant 0 : i32
    return %c0_i32, %c0_i32_0 : i32, i32
  }
  func.func @transform_7(%arg0: i32) -> (i32, i32) {
    %c0_i32 = arith.constant 0 : i32
    %c0_i32_0 = arith.constant 0 : i32
    return %arg0, %c0_i32 : i32, i32
  }
}

</mosaic_0001>

<llo_original>
// kernel: tpu_custom_call.1
$region0: #{tpu_custom_call.1}
  #allocation0 [shape = 'u32[]', space=smem, size = 0x4, offset = 0x4, fixed_abs, tag = 'smem constant byte address 0x4 - core index']
  #allocation1 [shape = 'u32[144,128]{1,0:T(1,128)}', space=vmem, size = 0x12000, scoped, tag = 'internal scratch']
  %s0 = inlined_call_operand.vmem [shape: bf16[8,128], index: 0, kind: input, shape index: {}]
  %s1 = inlined_call_operand.vmem [shape: bf16[128,128], index: 1, kind: input, shape index: {}]
  %s2 = inlined_call_operand.vmem [shape: f32[1,128], index: 2, kind: input, shape index: {}]
  %s3 = inlined_call_operand.vmem [shape: bf16[128,256], index: 3, kind: input, shape index: {}]
  %s4 = inlined_call_operand.vmem [shape: f32[1,256], index: 4, kind: input, shape index: {}]
  %s5 = inlined_call_operand.vmem [shape: bf16[256,512], index: 5, kind: input, shape index: {}]
  %s6 = inlined_call_operand.vmem [shape: bf16[512,784], index: 6, kind: input, shape index: {}]
  %s7 = inlined_call_operand.hbm [shape: f32[8,784], index: 7, kind: output, shape index: {}]
  %s8 = sld [smem:[#allocation0]]
  $region38: #{tpu_custom_call.1} parent=0
    _
  %s10 = ssub.s32 1, %s8
  %s11 = scalar_select 0, %s10, %s8
  $region1: #{tpu_custom_call.1} parent=0
    #allocation2 [shape = 'u8[28672]{0}', space=vmem, size = 0x7000, scoped, tag = 'output window, operand 0, single buffered']
    #allocation3 [shape = 's32[1]{0}', space=sflag, size = 0x4, scoped, tag = 'scoped memory for tpu_custom_call.1']
    %12 = vsyncpa [#allocation3], 0
    // Predicated region
    $region2: #{tpu_custom_call.1} parent=1 // pred_check
      _
    $region3: #{tpu_custom_call.1} parent=1 // pred_check_branch
      %14 = sbr.rel (0) target = $region5
    $region4: #{tpu_custom_call.1} parent=1 // pred_region
      _
    $region5: #{tpu_custom_call.1} parent=1 // pred_fallthru
      _
    // Predicated region
    $region6: #{tpu_custom_call.1} parent=1 // pred_check
      _
    $region7: #{tpu_custom_call.1} parent=1 // pred_check_branch
      %16 = sbr.rel (0) target = $region9
    $region8: #{tpu_custom_call.1} parent=1 // pred_region
      _
    $region9: #{tpu_custom_call.1} parent=1 // pred_fallthru
      _
    // Predicated region
    $region10: #{tpu_custom_call.1} parent=1 // pred_check
      _
    $region11: #{tpu_custom_call.1} parent=1 // pred_check_branch
      %18 = sbr.rel (0) target = $region13
    $region12: #{tpu_custom_call.1} parent=1 // pred_region
      _
    $region13: #{tpu_custom_call.1} parent=1 // pred_fallthru
      _
    // Predicated region
    $region14: #{tpu_custom_call.1} parent=1 // pred_check
      _
    $region15: #{tpu_custom_call.1} parent=1 // pred_check_branch
      %20 = sbr.rel (0) target = $region17
    $region16: #{tpu_custom_call.1} parent=1 // pred_region
      _
    $region17: #{tpu_custom_call.1} parent=1 // pred_fallthru
      _
    // Predicated region
    $region18: #{tpu_custom_call.1} parent=1 // pred_check
      _
    $region19: #{tpu_custom_call.1} parent=1 // pred_check_branch
      %22 = sbr.rel (0) target = $region21
    $region20: #{tpu_custom_call.1} parent=1 // pred_region
      _
    $region21: #{tpu_custom_call.1} parent=1 // pred_fallthru
      _
    // Predicated region
    $region22: #{tpu_custom_call.1} parent=1 // pred_check
      _
    $region23: #{tpu_custom_call.1} parent=1 // pred_check_branch
      %24 = sbr.rel (0) target = $region25
    $region24: #{tpu_custom_call.1} parent=1 // pred_region
      _
    $region25: #{tpu_custom_call.1} parent=1 // pred_fallthru
      _
    // Predicated region
    $region26: #{tpu_custom_call.1} parent=1 // pred_check
      _
    $region27: #{tpu_custom_call.1} parent=1 // pred_check_branch
      %26 = sbr.rel (0) target = $region29
    $region28: #{tpu_custom_call.1} parent=1 // pred_region
      _
    $region29: #{tpu_custom_call.1} parent=1 // pred_fallthru
      _
    %v28 = vld [vmem:[%s0] sm:$0xf]
    %v29 = vld [vmem:[%s1] sm:$0xf]
    %v30 = vld [vmem:[%s1 + $0x4] sm:$0xf]
    %v31 = vld [vmem:[%s1 + $0x8] sm:$0xf]
    %v32 = vld [vmem:[%s1 + $0xc] sm:$0xf]
    %v33 = vld [vmem:[%s1 + $0x10] sm:$0xf]
    %v34 = vld [vmem:[%s1 + $0x14] sm:$0xf]
    %v35 = vld [vmem:[%s1 + $0x18] sm:$0xf]
    %v36 = vld [vmem:[%s1 + $0x1c] sm:$0xf]
    %v37 = vld [vmem:[%s1 + $0x20] sm:$0xf]
    %v38 = vld [vmem:[%s1 + $0x24] sm:$0xf]
    %v39 = vld [vmem:[%s1 + $0x28] sm:$0xf]
    %v40 = vld [vmem:[%s1 + $0x2c] sm:$0xf]
    %v41 = vld [vmem:[%s1 + $0x30] sm:$0xf]
    %v42 = vld [vmem:[%s1 + $0x34] sm:$0xf]
    %v43 = vld [vmem:[%s1 + $0x38] sm:$0xf]
    %v44 = vld [vmem:[%s1 + $0x3c] sm:$0xf]
    %v45 = vld [vmem:[%s2] sm:$0x1]
    %v47 = vlaneseq
    %v48 = vshrl.u32 %v47, 7
    %v49 = vsub.s32 0, %v48
    %v50 = vrot.slane %v45, %v49
    %v68 = vunpack.c.l.b16 %v29
    %v69 = vunpack.c.l.b16 %v30
    %v70 = vunpack.c.l.b16 %v31
    %v71 = vunpack.c.l.b16 %v32
    %v72 = vunpack.c.l.b16 %v33
    %v73 = vunpack.c.l.b16 %v34
    %v74 = vunpack.c.l.b16 %v35
    %v75 = vunpack.c.l.b16 %v36
    %v76 = vunpack.c.l.b16 %v37
    %v77 = vunpack.c.l.b16 %v38
    %v78 = vunpack.c.l.b16 %v39
    %v79 = vunpack.c.l.b16 %v40
    %v80 = vunpack.c.l.b16 %v41
    %v81 = vunpack.c.l.b16 %v42
    %v82 = vunpack.c.l.b16 %v43
    %v83 = vunpack.c.l.b16 %v44
    %v84 = vpack.c.b16 %v69, %v68
    %v85 = vpack.c.b16 %v71, %v70
    %v86 = vpack.c.b16 %v73, %v72
    %v87 = vpack.c.b16 %v75, %v74
    %v88 = vpack.c.b16 %v77, %v76
    %v89 = vpack.c.b16 %v79, %v78
    %v90 = vpack.c.b16 %v81, %v80
    %v91 = vpack.c.b16 %v83, %v82
    %100 = vmatprep.subr.bf16.mxu0 0
    %101 = vmatpush1.bf16.msra.mxu0 %v91
    %102 = vmatprep.subr.bf16.mxu0 0
    %103 = vmatpush1.bf16.msra.mxu0 %v90
    %104 = vmatprep.subr.bf16.mxu0 0
    %105 = vmatpush1.bf16.msra.mxu0 %v89
    %106 = vmatprep.subr.bf16.mxu0 0
    %107 = vmatpush1.bf16.msra.mxu0 %v88
    %108 = vmatprep.subr.bf16.mxu0 0
    %109 = vmatpush1.bf16.msra.mxu0 %v87
    %110 = vmatprep.subr.bf16.mxu0 0
    %111 = vmatpush1.bf16.msra.mxu0 %v86
    %112 = vmatprep.subr.bf16.mxu0 0
    %113 = vmatpush1.bf16.msra.mxu0 %v85
    %114 = vmatprep.subr.bf16.mxu0 0
    %115 = vmatpush1.bf16.msra.mxu0 %v84
    %116 = vmatprep.subr.bf16.mxu0 0
    %117 = vmatpush2.bf16.msra.mxu0 0
    %118 = vmatprep.subr.bf16.mxu0 0
    %119 = vmatpush2.bf16.msra.mxu0 0
    %120 = vmatprep.subr.bf16.mxu0 0
    %121 = vmatpush2.bf16.msra.mxu0 0
    %122 = vmatprep.subr.bf16.mxu0 0
    %123 = vmatpush2.bf16.msra.mxu0 0
    %124 = vmatprep.subr.bf16.mxu0 0
    %125 = vmatpush2.bf16.msra.mxu0 0
    %126 = vmatprep.subr.bf16.mxu0 0
    %127 = vmatpush2.bf16.msra.mxu0 0
    %128 = vmatprep.subr.bf16.mxu0 0
    %129 = vmatpush2.bf16.msra.mxu0 0
    %130 = vmatprep.subr.bf16.mxu0 0
    %131 = vmatpush2.bf16.msra.mxu0 0
    %132 = vmatprep.mubr.bf16.mxu0 0
    %133 = vmatmul.mubr.bf16.gmra.mxu0 %v28
    %v134 = vpop.f32.mrf.mxu0
    %v135 = vadd.f32 %v50, %v134
    %v136 = vpop.f32.mrf.mxu0
    %v137 = vpop.f32.mrf.mxu0
    %v138 = vpop.f32.mrf.mxu0
    %139 = vdwg.mxu0
    %v140 = vmax.f32 %v135, 0.0
    %v141 = vpack.c.bf16 %v140, %v140
    %v142 = vld [vmem:[%s3] sm:$0xff]
    %v143 = vld [vmem:[%s3 + $0x8] sm:$0xff]
    %v144 = vld [vmem:[%s3 + $0x10] sm:$0xff]
    %v145 = vld [vmem:[%s3 + $0x18] sm:$0xff]
    %v146 = vld [vmem:[%s3 + $0x20] sm:$0xff]
    %v147 = vld [vmem:[%s3 + $0x28] sm:$0xff]
    %v148 = vld [vmem:[%s3 + $0x30] sm:$0xff]
    %v149 = vld [vmem:[%s3 + $0x38] sm:$0xff]
    %v150 = vld [vmem:[%s3 + $0x40] sm:$0xff]
    %v151 = vld [vmem:[%s3 + $0x48] sm:$0xff]
    %v152 = vld [vmem:[%s3 + $0x50] sm:$0xff]
    %v153 = vld [vmem:[%s3 + $0x58] sm:$0xff]
    %v154 = vld [vmem:[%s3 + $0x60] sm:$0xff]
    %v155 = vld [vmem:[%s3 + $0x68] sm:$0xff]
    %v156 = vld [vmem:[%s3 + $0x70] sm:$0xff]
    %v157 = vld [vmem:[%s3 + $0x78] sm:$0xff]
    %v158 = vld [vmem:[%s4] sm:$0x3]
    %v160 = vlaneseq
    %v161 = vshrl.u32 %v160, 7
    %v162 = vsub.s32 0, %v161
    %v163 = vrot.slane %v158, %v162
    %v164 = vlaneseq
    %v165 = vshrl.u32 %v164, 7
    %v166 = vsub.s32 1, %v165
    %v167 = vrot.slane %v158, %v166
    %v186 = vunpack.c.l.b16 %v142
    %v187 = vunpack.c.h.b16 %v142
    %v188 = vunpack.c.l.b16 %v143
    %v189 = vunpack.c.h.b16 %v143
    %v190 = vunpack.c.l.b16 %v144
    %v191 = vunpack.c.h.b16 %v144
    %v192 = vunpack.c.l.b16 %v145
    %v193 = vunpack.c.h.b16 %v145
    %v194 = vunpack.c.l.b16 %v146
    %v195 = vunpack.c.h.b16 %v146
    %v196 = vunpack.c.l.b16 %v147
    %v197 = vunpack.c.h.b16 %v147
    %v198 = vunpack.c.l.b16 %v148
    %v199 = vunpack.c.h.b16 %v148
    %v200 = vunpack.c.l.b16 %v149
    %v201 = vunpack.c.h.b16 %v149
    %v202 = vunpack.c.l.b16 %v150
    %v203 = vunpack.c.h.b16 %v150
    %v204 = vunpack.c.l.b16 %v151
    %v205 = vunpack.c.h.b16 %v151
    %v206 = vunpack.c.l.b16 %v152
    %v207 = vunpack.c.h.b16 %v152
    %v208 = vunpack.c.l.b16 %v153
    %v209 = vunpack.c.h.b16 %v153
    %v210 = vunpack.c.l.b16 %v154
    %v211 = vunpack.c.h.b16 %v154
    %v212 = vunpack.c.l.b16 %v155
    %v213 = vunpack.c.h.b16 %v155
    %v214 = vunpack.c.l.b16 %v156
    %v215 = vunpack.c.h.b16 %v156
    %v216 = vunpack.c.l.b16 %v157
    %v217 = vunpack.c.h.b16 %v157
    %v218 = vpack.c.b16 %v188, %v186
    %v219 = vpack.c.b16 %v189, %v187
    %v220 = vpack.c.b16 %v192, %v190
    %v221 = vpack.c.b16 %v193, %v191
    %v222 = vpack.c.b16 %v196, %v194
    %v223 = vpack.c.b16 %v197, %v195
    %v224 = vpack.c.b16 %v200, %v198
    %v225 = vpack.c.b16 %v201, %v199
    %v226 = vpack.c.b16 %v204, %v202
    %v227 = vpack.c.b16 %v205, %v203
    %v228 = vpack.c.b16 %v208, %v206
    %v229 = vpack.c.b16 %v209, %v207
    %v230 = vpack.c.b16 %v212, %v210
    %v231 = vpack.c.b16 %v213, %v211
    %v232 = vpack.c.b16 %v216, %v214
    %v233 = vpack.c.b16 %v217, %v215
    %250 = vmatprep.subr.bf16.mxu0 %v233
    %251 = vmatpush1.bf16.msra.mxu0 %v232
    %252 = vmatprep.subr.bf16.mxu0 %v231
    %253 = vmatpush1.bf16.msra.mxu0 %v230
    %254 = vmatprep.subr.bf16.mxu0 %v229
    %255 = vmatpush1.bf16.msra.mxu0 %v228
    %256 = vmatprep.subr.bf16.mxu0 %v227
    %257 = vmatpush1.bf16.msra.mxu0 %v226
    %258 = vmatprep.subr.bf16.mxu0 %v225
    %259 = vmatpush1.bf16.msra.mxu0 %v224
    %260 = vmatprep.subr.bf16.mxu0 %v223
    %261 = vmatpush1.bf16.msra.mxu0 %v222
    %262 = vmatprep.subr.bf16.mxu0 %v221
    %263 = vmatpush1.bf16.msra.mxu0 %v220
    %264 = vmatprep.subr.bf16.mxu0 %v219
    %265 = vmatpush1.bf16.msra.mxu0 %v218
    %266 = vmatprep.subr.bf16.mxu0 0
    %267 = vmatpush2.bf16.msra.mxu0 0
    %268 = vmatprep.subr.bf16.mxu0 0
    %269 = vmatpush2.bf16.msra.mxu0 0
    %270 = vmatprep.subr.bf16.mxu0 0
    %271 = vmatpush2.bf16.msra.mxu0 0
    %272 = vmatprep.subr.bf16.mxu0 0
    %273 = vmatpush2.bf16.msra.mxu0 0
    %274 = vmatprep.subr.bf16.mxu0 0
    %275 = vmatpush2.bf16.msra.mxu0 0
    %276 = vmatprep.subr.bf16.mxu0 0
    %277 = vmatpush2.bf16.msra.mxu0 0
    %278 = vmatprep.subr.bf16.mxu0 0
    %279 = vmatpush2.bf16.msra.mxu0 0
    %280 = vmatprep.subr.bf16.mxu0 0
    %281 = vmatpush2.bf16.msra.mxu0 0
    %282 = vmatprep.mubr.bf16.mxu0 0
    %283 = vmatmul.mubr.bf16.gmra.mxu0 %v141
    %v284 = vpop.f32.mrf.mxu0
    %v285 = vadd.f32 %v163, %v284
    %v286 = vpop.f32.mrf.mxu0
    %v287 = vadd.f32 %v167, %v286
    %v288 = vpop.f32.mrf.mxu0
    %v289 = vpop.f32.mrf.mxu0
    %290 = vdwg.mxu0
    %v291 = vmax.f32 %v285, 0.0
    %v292 = vmax.f32 %v287, 0.0
    %v293 = vpack.c.bf16 %v291, %v291
    %v294 = vpack.c.bf16 %v292, %v292
    %v295 = vld [vmem:[%s5] sm:$0xff]
    %v296 = vld [vmem:[%s5 + $0x8] sm:$0xff]
    %v297 = vld [vmem:[%s5 + $0x10] sm:$0xff]
    %v298 = vld [vmem:[%s5 + $0x18] sm:$0xff]
    %v299 = vld [vmem:[%s5 + $0x20] sm:$0xff]
    %v300 = vld [vmem:[%s5 + $0x28] sm:$0xff]
    %v301 = vld [vmem:[%s5 + $0x30] sm:$0xff]
    %v302 = vld [vmem:[%s5 + $0x38] sm:$0xff]
    %v303 = vld [vmem:[%s5 + $0x40] sm:$0xff]
    %v304 = vld [vmem:[%s5 + $0x48] sm:$0xff]
    %v305 = vld [vmem:[%s5 + $0x50] sm:$0xff]
    %v306 = vld [vmem:[%s5 + $0x58] sm:$0xff]
    %v307 = vld [vmem:[%s5 + $0x60] sm:$0xff]
    %v308 = vld [vmem:[%s5 + $0x68] sm:$0xff]
    %v309 = vld [vmem:[%s5 + $0x70] sm:$0xff]
    %v310 = vld [vmem:[%s5 + $0x78] sm:$0xff]
    %v311 = vld [vmem:[%s5 + $0x80] sm:$0xff]
    %v312 = vld [vmem:[%s5 + $0x88] sm:$0xff]
    %v313 = vld [vmem:[%s5 + $0x90] sm:$0xff]
    %v314 = vld [vmem:[%s5 + $0x98] sm:$0xff]
    %v315 = vld [vmem:[%s5 + $0xa0] sm:$0xff]
    %v316 = vld [vmem:[%s5 + $0xa8] sm:$0xff]
    %v317 = vld [vmem:[%s5 + $0xb0] sm:$0xff]
    %v318 = vld [vmem:[%s5 + $0xb8] sm:$0xff]
    %v319 = vld [vmem:[%s5 + $0xc0] sm:$0xff]
    %v320 = vld [vmem:[%s5 + $0xc8] sm:$0xff]
    %v321 = vld [vmem:[%s5 + $0xd0] sm:$0xff]
    %v322 = vld [vmem:[%s5 + $0xd8] sm:$0xff]
    %v323 = vld [vmem:[%s5 + $0xe0] sm:$0xff]
    %v324 = vld [vmem:[%s5 + $0xe8] sm:$0xff]
    %v325 = vld [vmem:[%s5 + $0xf0] sm:$0xff]
    %v326 = vld [vmem:[%s5 + $0xf8] sm:$0xff]
    %v327 = vld [vmem:[%s5 + $0x100] sm:$0xff]
    %v328 = vld [vmem:[%s5 + $0x108] sm:$0xff]
    %v329 = vld [vmem:[%s5 + $0x110] sm:$0xff]
    %v330 = vld [vmem:[%s5 + $0x118] sm:$0xff]
    %v331 = vld [vmem:[%s5 + $0x120] sm:$0xff]
    %v332 = vld [vmem:[%s5 + $0x128] sm:$0xff]
    %v333 = vld [vmem:[%s5 + $0x130] sm:$0xff]
    %v334 = vld [vmem:[%s5 + $0x138] sm:$0xff]
    %v335 = vld [vmem:[%s5 + $0x140] sm:$0xff]
    %v336 = vld [vmem:[%s5 + $0x148] sm:$0xff]
    %v337 = vld [vmem:[%s5 + $0x150] sm:$0xff]
    %v338 = vld [vmem:[%s5 + $0x158] sm:$0xff]
    %v339 = vld [vmem:[%s5 + $0x160] sm:$0xff]
    %v340 = vld [vmem:[%s5 + $0x168] sm:$0xff]
    %v341 = vld [vmem:[%s5 + $0x170] sm:$0xff]
    %v342 = vld [vmem:[%s5 + $0x178] sm:$0xff]
    %v343 = vld [vmem:[%s5 + $0x180] sm:$0xff]
    %v344 = vld [vmem:[%s5 + $0x188] sm:$0xff]
    %v345 = vld [vmem:[%s5 + $0x190] sm:$0xff]
    %v346 = vld [vmem:[%s5 + $0x198] sm:$0xff]
    %v347 = vld [vmem:[%s5 + $0x1a0] sm:$0xff]
    %v348 = vld [vmem:[%s5 + $0x1a8] sm:$0xff]
    %v349 = vld [vmem:[%s5 + $0x1b0] sm:$0xff]
    %v350 = vld [vmem:[%s5 + $0x1b8] sm:$0xff]
    %v351 = vld [vmem:[%s5 + $0x1c0] sm:$0xff]
    %v352 = vld [vmem:[%s5 + $0x1c8] sm:$0xff]
    %v353 = vld [vmem:[%s5 + $0x1d0] sm:$0xff]
    %v354 = vld [vmem:[%s5 + $0x1d8] sm:$0xff]
    %v355 = vld [vmem:[%s5 + $0x1e0] sm:$0xff]
    %v356 = vld [vmem:[%s5 + $0x1e8] sm:$0xff]
    %v357 = vld [vmem:[%s5 + $0x1f0] sm:$0xff]
    %v358 = vld [vmem:[%s5 + $0x1f8] sm:$0xff]
    %v423 = vunpack.c.l.b16 %v295
    %v424 = vunpack.c.h.b16 %v295
    %v425 = vunpack.c.l.b16 %v296
    %v426 = vunpack.c.h.b16 %v296
    %v427 = vunpack.c.l.b16 %v297
    %v428 = vunpack.c.h.b16 %v297
    %v429 = vunpack.c.l.b16 %v298
    %v430 = vunpack.c.h.b16 %v298
    %v431 = vunpack.c.l.b16 %v299
    %v432 = vunpack.c.h.b16 %v299
    %v433 = vunpack.c.l.b16 %v300
    %v434 = vunpack.c.h.b16 %v300
    %v435 = vunpack.c.l.b16 %v301
    %v436 = vunpack.c.h.b16 %v301
    %v437 = vunpack.c.l.b16 %v302
    %v438 = vunpack.c.h.b16 %v302
    %v439 = vunpack.c.l.b16 %v303
    %v440 = vunpack.c.h.b16 %v303
    %v441 = vunpack.c.l.b16 %v304
    %v442 = vunpack.c.h.b16 %v304
    %v443 = vunpack.c.l.b16 %v305
    %v444 = vunpack.c.h.b16 %v305
    %v445 = vunpack.c.l.b16 %v306
    %v446 = vunpack.c.h.b16 %v306
    %v447 = vunpack.c.l.b16 %v307
    %v448 = vunpack.c.h.b16 %v307
    %v449 = vunpack.c.l.b16 %v308
    %v450 = vunpack.c.h.b16 %v308
    %v451 = vunpack.c.l.b16 %v309
    %v452 = vunpack.c.h.b16 %v309
    %v453 = vunpack.c.l.b16 %v310
    %v454 = vunpack.c.h.b16 %v310
    %v455 = vunpack.c.l.b16 %v311
    %v456 = vunpack.c.h.b16 %v311
    %v457 = vunpack.c.l.b16 %v312
    %v458 = vunpack.c.h.b16 %v312
    %v459 = vunpack.c.l.b16 %v313
    %v460 = vunpack.c.h.b16 %v313
    %v461 = vunpack.c.l.b16 %v314
    %v462 = vunpack.c.h.b16 %v314
    %v463 = vunpack.c.l.b16 %v315
    %v464 = vunpack.c.h.b16 %v315
    %v465 = vunpack.c.l.b16 %v316
    %v466 = vunpack.c.h.b16 %v316
    %v467 = vunpack.c.l.b16 %v317
    %v468 = vunpack.c.h.b16 %v317
    %v469 = vunpack.c.l.b16 %v318
    %v470 = vunpack.c.h.b16 %v318
    %v471 = vunpack.c.l.b16 %v319
    %v472 = vunpack.c.h.b16 %v319
    %v473 = vunpack.c.l.b16 %v320
    %v474 = vunpack.c.h.b16 %v320
    %v475 = vunpack.c.l.b16 %v321
    %v476 = vunpack.c.h.b16 %v321
    %v477 = vunpack.c.l.b16 %v322
    %v478 = vunpack.c.h.b16 %v322
    %v479 = vunpack.c.l.b16 %v323
    %v480 = vunpack.c.h.b16 %v323
    %v481 = vunpack.c.l.b16 %v324
    %v482 = vunpack.c.h.b16 %v324
    %v483 = vunpack.c.l.b16 %v325
    %v484 = vunpack.c.h.b16 %v325
    %v485 = vunpack.c.l.b16 %v326
    %v486 = vunpack.c.h.b16 %v326
    %v487 = vunpack.c.l.b16 %v327
    %v488 = vunpack.c.h.b16 %v327
    %v489 = vunpack.c.l.b16 %v328
    %v490 = vunpack.c.h.b16 %v328
    %v491 = vunpack.c.l.b16 %v329
    %v492 = vunpack.c.h.b16 %v329
    %v493 = vunpack.c.l.b16 %v330
    %v494 = vunpack.c.h.b16 %v330
    %v495 = vunpack.c.l.b16 %v331
    %v496 = vunpack.c.h.b16 %v331
    %v497 = vunpack.c.l.b16 %v332
    %v498 = vunpack.c.h.b16 %v332
    %v499 = vunpack.c.l.b16 %v333
    %v500 = vunpack.c.h.b16 %v333
    %v501 = vunpack.c.l.b16 %v334
    %v502 = vunpack.c.h.b16 %v334
    %v503 = vunpack.c.l.b16 %v335
    %v504 = vunpack.c.h.b16 %v335
    %v505 = vunpack.c.l.b16 %v336
    %v506 = vunpack.c.h.b16 %v336
    %v507 = vunpack.c.l.b16 %v337
    %v508 = vunpack.c.h.b16 %v337
    %v509 = vunpack.c.l.b16 %v338
    %v510 = vunpack.c.h.b16 %v338
    %v511 = vunpack.c.l.b16 %v339
    %v512 = vunpack.c.h.b16 %v339
    %v513 = vunpack.c.l.b16 %v340
    %v514 = vunpack.c.h.b16 %v340
    %v515 = vunpack.c.l.b16 %v341
    %v516 = vunpack.c.h.b16 %v341
    %v517 = vunpack.c.l.b16 %v342
    %v518 = vunpack.c.h.b16 %v342
    %v519 = vunpack.c.l.b16 %v343
    %v520 = vunpack.c.h.b16 %v343
    %v521 = vunpack.c.l.b16 %v344
    %v522 = vunpack.c.h.b16 %v344
    %v523 = vunpack.c.l.b16 %v345
    %v524 = vunpack.c.h.b16 %v345
    %v525 = vunpack.c.l.b16 %v346
    %v526 = vunpack.c.h.b16 %v346
    %v527 = vunpack.c.l.b16 %v347
    %v528 = vunpack.c.h.b16 %v347
    %v529 = vunpack.c.l.b16 %v348
    %v530 = vunpack.c.h.b16 %v348
    %v531 = vunpack.c.l.b16 %v349
    %v532 = vunpack.c.h.b16 %v349
    %v533 = vunpack.c.l.b16 %v350
    %v534 = vunpack.c.h.b16 %v350
    %v535 = vunpack.c.l.b16 %v351
    %v536 = vunpack.c.h.b16 %v351
    %v537 = vunpack.c.l.b16 %v352
    %v538 = vunpack.c.h.b16 %v352
    %v539 = vunpack.c.l.b16 %v353
    %v540 = vunpack.c.h.b16 %v353
    %v541 = vunpack.c.l.b16 %v354
    %v542 = vunpack.c.h.b16 %v354
    %v543 = vunpack.c.l.b16 %v355
    %v544 = vunpack.c.h.b16 %v355
    %v545 = vunpack.c.l.b16 %v356
    %v546 = vunpack.c.h.b16 %v356
    %v547 = vunpack.c.l.b16 %v357
    %v548 = vunpack.c.h.b16 %v357
    %v549 = vunpack.c.l.b16 %v358
    %v550 = vunpack.c.h.b16 %v358
    %v551 = vpack.c.b16 %v427, %v423
    %v552 = vpack.c.b16 %v428, %v424
    %v553 = vpack.c.b16 %v429, %v425
    %v554 = vpack.c.b16 %v430, %v426
    %v555 = vpack.c.b16 %v435, %v431
    %v556 = vpack.c.b16 %v436, %v432
    %v557 = vpack.c.b16 %v437, %v433
    %v558 = vpack.c.b16 %v438, %v434
    %v559 = vpack.c.b16 %v443, %v439
    %v560 = vpack.c.b16 %v444, %v440
    %v561 = vpack.c.b16 %v445, %v441
    %v562 = vpack.c.b16 %v446, %v442
    %v563 = vpack.c.b16 %v451, %v447
    %v564 = vpack.c.b16 %v452, %v448
    %v565 = vpack.c.b16 %v453, %v449
    %v566 = vpack.c.b16 %v454, %v450
    %v567 = vpack.c.b16 %v459, %v455
    %v568 = vpack.c.b16 %v460, %v456
    %v569 = vpack.c.b16 %v461, %v457
    %v570 = vpack.c.b16 %v462, %v458
    %v571 = vpack.c.b16 %v467, %v463
    %v572 = vpack.c.b16 %v468, %v464
    %v573 = vpack.c.b16 %v469, %v465
    %v574 = vpack.c.b16 %v470, %v466
    %v575 = vpack.c.b16 %v475, %v471
    %v576 = vpack.c.b16 %v476, %v472
    %v577 = vpack.c.b16 %v477, %v473
    %v578 = vpack.c.b16 %v478, %v474
    %v579 = vpack.c.b16 %v483, %v479
    %v580 = vpack.c.b16 %v484, %v480
    %v581 = vpack.c.b16 %v485, %v481
    %v582 = vpack.c.b16 %v486, %v482
    %v583 = vpack.c.b16 %v491, %v487
    %v584 = vpack.c.b16 %v492, %v488
    %v585 = vpack.c.b16 %v493, %v489
    %v586 = vpack.c.b16 %v494, %v490
    %v587 = vpack.c.b16 %v499, %v495
    %v588 = vpack.c.b16 %v500, %v496
    %v589 = vpack.c.b16 %v501, %v497
    %v590 = vpack.c.b16 %v502, %v498
    %v591 = vpack.c.b16 %v507, %v503
    %v592 = vpack.c.b16 %v508, %v504
    %v593 = vpack.c.b16 %v509, %v505
    %v594 = vpack.c.b16 %v510, %v506
    %v595 = vpack.c.b16 %v515, %v511
    %v596 = vpack.c.b16 %v516, %v512
    %v597 = vpack.c.b16 %v517, %v513
    %v598 = vpack.c.b16 %v518, %v514
    %v599 = vpack.c.b16 %v523, %v519
    %v600 = vpack.c.b16 %v524, %v520
    %v601 = vpack.c.b16 %v525, %v521
    %v602 = vpack.c.b16 %v526, %v522
    %v603 = vpack.c.b16 %v531, %v527
    %v604 = vpack.c.b16 %v532, %v528
    %v605 = vpack.c.b16 %v533, %v529
    %v606 = vpack.c.b16 %v534, %v530
    %v607 = vpack.c.b16 %v539, %v535
    %v608 = vpack.c.b16 %v540, %v536
    %v609 = vpack.c.b16 %v541, %v537
    %v610 = vpack.c.b16 %v542, %v538
    %v611 = vpack.c.b16 %v547, %v543
    %v612 = vpack.c.b16 %v548, %v544
    %v613 = vpack.c.b16 %v549, %v545
    %v614 = vpack.c.b16 %v550, %v546
    %679 = vmatprep.subr.bf16.mxu0 %v580
    %680 = vmatpush1.bf16.msra.mxu0 %v579
    %681 = vmatprep.subr.bf16.mxu0 %v576
    %682 = vmatpush1.bf16.msra.mxu0 %v575
    %683 = vmatprep.subr.bf16.mxu0 %v572
    %684 = vmatpush1.bf16.msra.mxu0 %v571
    %685 = vmatprep.subr.bf16.mxu0 %v568
    %686 = vmatpush1.bf16.msra.mxu0 %v567
    %687 = vmatprep.subr.bf16.mxu0 %v564
    %688 = vmatpush1.bf16.msra.mxu0 %v563
    %689 = vmatprep.subr.bf16.mxu0 %v560
    %690 = vmatpush1.bf16.msra.mxu0 %v559
    %691 = vmatprep.subr.bf16.mxu0 %v556
    %692 = vmatpush1.bf16.msra.mxu0 %v555
    %693 = vmatprep.subr.bf16.mxu0 %v552
    %694 = vmatpush1.bf16.msra.mxu0 %v551
    %695 = vmatprep.subr.bf16.mxu0 %v612
    %696 = vmatpush2.bf16.msra.mxu0 %v611
    %697 = vmatprep.subr.bf16.mxu0 %v608
    %698 = vmatpush2.bf16.msra.mxu0 %v607
    %699 = vmatprep.subr.bf16.mxu0 %v604
    %700 = vmatpush2.bf16.msra.mxu0 %v603
    %701 = vmatprep.subr.bf16.mxu0 %v600
    %702 = vmatpush2.bf16.msra.mxu0 %v599
    %703 = vmatprep.subr.bf16.mxu0 %v596
    %704 = vmatpush2.bf16.msra.mxu0 %v595
    %705 = vmatprep.subr.bf16.mxu0 %v592
    %706 = vmatpush2.bf16.msra.mxu0 %v591
    %707 = vmatprep.subr.bf16.mxu0 %v588
    %708 = vmatpush2.bf16.msra.mxu0 %v587
    %709 = vmatprep.subr.bf16.mxu0 %v584
    %710 = vmatpush2.bf16.msra.mxu0 %v583
    %711 = vmatprep.mubr.bf16.mxu0 %v294
    %712 = vmatmul.mubr.bf16.gmra.mxu0 %v293
    %v713 = vpop.f32.mrf.mxu0
    %v714 = vadd.f32 0.0, %v713
    %v715 = vpop.f32.mrf.mxu0
    %v716 = vadd.f32 0.0, %v715
    %v717 = vpop.f32.mrf.mxu0
    %v718 = vpop.f32.mrf.mxu0
    %719 = vdwg.mxu0
    %720 = vmatprep.subr.bf16.mxu0 %v582
    %721 = vmatpush1.bf16.msra.mxu0 %v581
    %722 = vmatprep.subr.bf16.mxu0 %v578
    %723 = vmatpush1.bf16.msra.mxu0 %v577
    %724 = vmatprep.subr.bf16.mxu0 %v574
    %725 = vmatpush1.bf16.msra.mxu0 %v573
    %726 = vmatprep.subr.bf16.mxu0 %v570
    %727 = vmatpush1.bf16.msra.mxu0 %v569
    %728 = vmatprep.subr.bf16.mxu0 %v566
    %729 = vmatpush1.bf16.msra.mxu0 %v565
    %730 = vmatprep.subr.bf16.mxu0 %v562
    %731 = vmatpush1.bf16.msra.mxu0 %v561
    %732 = vmatprep.subr.bf16.mxu0 %v558
    %733 = vmatpush1.bf16.msra.mxu0 %v557
    %734 = vmatprep.subr.bf16.mxu0 %v554
    %735 = vmatpush1.bf16.msra.mxu0 %v553
    %736 = vmatprep.subr.bf16.mxu0 %v614
    %737 = vmatpush2.bf16.msra.mxu0 %v613
    %738 = vmatprep.subr.bf16.mxu0 %v610
    %739 = vmatpush2.bf16.msra.mxu0 %v609
    %740 = vmatprep.subr.bf16.mxu0 %v606
    %741 = vmatpush2.bf16.msra.mxu0 %v605
    %742 = vmatprep.subr.bf16.mxu0 %v602
    %743 = vmatpush2.bf16.msra.mxu0 %v601
    %744 = vmatprep.subr.bf16.mxu0 %v598
    %745 = vmatpush2.bf16.msra.mxu0 %v597
    %746 = vmatprep.subr.bf16.mxu0 %v594
    %747 = vmatpush2.bf16.msra.mxu0 %v593
    %748 = vmatprep.subr.bf16.mxu0 %v590
    %749 = vmatpush2.bf16.msra.mxu0 %v589
    %750 = vmatprep.subr.bf16.mxu0 %v586
    %751 = vmatpush2.bf16.msra.mxu0 %v585
    %752 = vmatprep.mubr.bf16.mxu0 %v294
    %753 = vmatmul.mubr.bf16.gmra.mxu0 %v293
    %v754 = vpop.f32.mrf.mxu0
    %v755 = vadd.f32 0.0, %v754
    %v756 = vpop.f32.mrf.mxu0
    %v757 = vadd.f32 0.0, %v756
    %v758 = vpop.f32.mrf.mxu0
    %v759 = vpop.f32.mrf.mxu0
    %760 = vdwg.mxu0
    %v761 = vmax.f32 %v714, 0.0
    %v762 = vmax.f32 %v716, 0.0
    %v763 = vmax.f32 %v755, 0.0
    %v764 = vmax.f32 %v757, 0.0
    %v765 = vpack.c.bf16 %v761, %v761
    %v766 = vpack.c.bf16 %v762, %v762
    %v767 = vpack.c.bf16 %v763, %v763
    %v768 = vpack.c.bf16 %v764, %v764
    %v769 = vld [vmem:[%s6] sm:$0xff]
    %v770 = vld [vmem:[%s6 + $0x8] sm:$0xff]
    %v771 = vld [vmem:[%s6 + $0x10] sm:$0xff]
    %v772 = vld [vmem:[%s6 + $0x18] sm:$0xf]
    %v773 = vld [vmem:[%s6 + $0x1c] sm:$0xff]
    %v774 = vld [vmem:[%s6 + $0x24] sm:$0xff]
    %v775 = vld [vmem:[%s6 + $0x2c] sm:$0xff]
    %v776 = vld [vmem:[%s6 + $0x34] sm:$0xf]
    %v777 = vld [vmem:[%s6 + $0x38] sm:$0xff]
    %v778 = vld [vmem:[%s6 + $0x40] sm:$0xff]
    %v779 = vld [vmem:[%s6 + $0x48] sm:$0xff]
    %v780 = vld [vmem:[%s6 + $0x50] sm:$0xf]
    %v781 = vld [vmem:[%s6 + $0x54] sm:$0xff]
    %v782 = vld [vmem:[%s6 + $0x5c] sm:$0xff]
    %v783 = vld [vmem:[%s6 + $0x64] sm:$0xff]
    %v784 = vld [vmem:[%s6 + $0x6c] sm:$0xf]
    %v785 = vld [vmem:[%s6 + $0x70] sm:$0xff]
    %v786 = vld [vmem:[%s6 + $0x78] sm:$0xff]
    %v787 = vld [vmem:[%s6 + $0x80] sm:$0xff]
    %v788 = vld [vmem:[%s6 + $0x88] sm:$0xf]
    %v789 = vld [vmem:[%s6 + $0x8c] sm:$0xff]
    %v790 = vld [vmem:[%s6 + $0x94] sm:$0xff]
    %v791 = vld [vmem:[%s6 + $0x9c] sm:$0xff]
    %v792 = vld [vmem:[%s6 + $0xa4] sm:$0xf]
    %v793 = vld [vmem:[%s6 + $0xa8] sm:$0xff]
    %v794 = vld [vmem:[%s6 + $0xb0] sm:$0xff]
    %v795 = vld [vmem:[%s6 + $0xb8] sm:$0xff]
    %v796 = vld [vmem:[%s6 + $0xc0] sm:$0xf]
    %v797 = vld [vmem:[%s6 + $0xc4] sm:$0xff]
    %v798 = vld [vmem:[%s6 + $0xcc] sm:$0xff]
    %v799 = vld [vmem:[%s6 + $0xd4] sm:$0xff]
    %v800 = vld [vmem:[%s6 + $0xdc] sm:$0xf]
    %v801 = vld [vmem:[%s6 + $0xe0] sm:$0xff]
    %v802 = vld [vmem:[%s6 + $0xe8] sm:$0xff]
    %v803 = vld [vmem:[%s6 + $0xf0] sm:$0xff]
    %v804 = vld [vmem:[%s6 + $0xf8] sm:$0xf]
    %v805 = vld [vmem:[%s6 + $0xfc] sm:$0xff]
    %v806 = vld [vmem:[%s6 + $0x104] sm:$0xff]
    %v807 = vld [vmem:[%s6 + $0x10c] sm:$0xff]
    %v808 = vld [vmem:[%s6 + $0x114] sm:$0xf]
    %v809 = vld [vmem:[%s6 + $0x118] sm:$0xff]
    %v810 = vld [vmem:[%s6 + $0x120] sm:$0xff]
    %v811 = vld [vmem:[%s6 + $0x128] sm:$0xff]
    %v812 = vld [vmem:[%s6 + $0x130] sm:$0xf]
    %v813 = vld [vmem:[%s6 + $0x134] sm:$0xff]
    %v814 = vld [vmem:[%s6 + $0x13c] sm:$0xff]
    %v815 = vld [vmem:[%s6 + $0x144] sm:$0xff]
    %v816 = vld [vmem:[%s6 + $0x14c] sm:$0xf]
    %v817 = vld [vmem:[%s6 + $0x150] sm:$0xff]
    %v818 = vld [vmem:[%s6 + $0x158] sm:$0xff]
    %v819 = vld [vmem:[%s6 + $0x160] sm:$0xff]
    %v820 = vld [vmem:[%s6 + $0x168] sm:$0xf]
    %v821 = vld [vmem:[%s6 + $0x16c] sm:$0xff]
    %v822 = vld [vmem:[%s6 + $0x174] sm:$0xff]
    %v823 = vld [vmem:[%s6 + $0x17c] sm:$0xff]
    %v824 = vld [vmem:[%s6 + $0x184] sm:$0xf]
    %v825 = vld [vmem:[%s6 + $0x188] sm:$0xff]
    %v826 = vld [vmem:[%s6 + $0x190] sm:$0xff]
    %v827 = vld [vmem:[%s6 + $0x198] sm:$0xff]
    %v828 = vld [vmem:[%s6 + $0x1a0] sm:$0xf]
    %v829 = vld [vmem:[%s6 + $0x1a4] sm:$0xff]
    %v830 = vld [vmem:[%s6 + $0x1ac] sm:$0xff]
    %v831 = vld [vmem:[%s6 + $0x1b4] sm:$0xff]
    %v832 = vld [vmem:[%s6 + $0x1bc] sm:$0xf]
    %v833 = vld [vmem:[%s6 + $0x1c0] sm:$0xff]
    %v834 = vld [vmem:[%s6 + $0x1c8] sm:$0xff]
    %v835 = vld [vmem:[%s6 + $0x1d0] sm:$0xff]
    %v836 = vld [vmem:[%s6 + $0x1d8] sm:$0xf]
    %v837 = vld [vmem:[%s6 + $0x1dc] sm:$0xff]
    %v838 = vld [vmem:[%s6 + $0x1e4] sm:$0xff]
    %v839 = vld [vmem:[%s6 + $0x1ec] sm:$0xff]
    %v840 = vld [vmem:[%s6 + $0x1f4] sm:$0xf]
    %v841 = vld [vmem:[%s6 + $0x1f8] sm:$0xff]
    %v842 = vld [vmem:[%s6 + $0x200] sm:$0xff]
    %v843 = vld [vmem:[%s6 + $0x208] sm:$0xff]
    %v844 = vld [vmem:[%s6 + $0x210] sm:$0xf]
    %v845 = vld [vmem:[%s6 + $0x214] sm:$0xff]
    %v846 = vld [vmem:[%s6 + $0x21c] sm:$0xff]
    %v847 = vld [vmem:[%s6 + $0x224] sm:$0xff]
    %v848 = vld [vmem:[%s6 + $0x22c] sm:$0xf]
    %v849 = vld [vmem:[%s6 + $0x230] sm:$0xff]
    %v850 = vld [vmem:[%s6 + $0x238] sm:$0xff]
    %v851 = vld [vmem:[%s6 + $0x240] sm:$0xff]
    %v852 = vld [vmem:[%s6 + $0x248] sm:$0xf]
    %v853 = vld [vmem:[%s6 + $0x24c] sm:$0xff]
    %v854 = vld [vmem:[%s6 + $0x254] sm:$0xff]
    %v855 = vld [vmem:[%s6 + $0x25c] sm:$0xff]
    %v856 = vld [vmem:[%s6 + $0x264] sm:$0xf]
    %v857 = vld [vmem:[%s6 + $0x268] sm:$0xff]
    %v858 = vld [vmem:[%s6 + $0x270] sm:$0xff]
    %v859 = vld [vmem:[%s6 + $0x278] sm:$0xff]
    %v860 = vld [vmem:[%s6 + $0x280] sm:$0xf]
    %v861 = vld [vmem:[%s6 + $0x284] sm:$0xff]
    %v862 = vld [vmem:[%s6 + $0x28c] sm:$0xff]
    %v863 = vld [vmem:[%s6 + $0x294] sm:$0xff]
    %v864 = vld [vmem:[%s6 + $0x29c] sm:$0xf]
    %v865 = vld [vmem:[%s6 + $0x2a0] sm:$0xff]
    %v866 = vld [vmem:[%s6 + $0x2a8] sm:$0xff]
    %v867 = vld [vmem:[%s6 + $0x2b0] sm:$0xff]
    %v868 = vld [vmem:[%s6 + $0x2b8] sm:$0xf]
    %v869 = vld [vmem:[%s6 + $0x2bc] sm:$0xff]
    %v870 = vld [vmem:[%s6 + $0x2c4] sm:$0xff]
    %v871 = vld [vmem:[%s6 + $0x2cc] sm:$0xff]
    %v872 = vld [vmem:[%s6 + $0x2d4] sm:$0xf]
    %v873 = vld [vmem:[%s6 + $0x2d8] sm:$0xff]
    %v874 = vld [vmem:[%s6 + $0x2e0] sm:$0xff]
    %v875 = vld [vmem:[%s6 + $0x2e8] sm:$0xff]
    %v876 = vld [vmem:[%s6 + $0x2f0] sm:$0xf]
    %v877 = vld [vmem:[%s6 + $0x2f4] sm:$0xff]
    %v878 = vld [vmem:[%s6 + $0x2fc] sm:$0xff]
    %v879 = vld [vmem:[%s6 + $0x304] sm:$0xff]
    %v880 = vld [vmem:[%s6 + $0x30c] sm:$0xf]
    %v881 = vld [vmem:[%s6 + $0x310] sm:$0xff]
    %v882 = vld [vmem:[%s6 + $0x318] sm:$0xff]
    %v883 = vld [vmem:[%s6 + $0x320] sm:$0xff]
    %v884 = vld [vmem:[%s6 + $0x328] sm:$0xf]
    %v885 = vld [vmem:[%s6 + $0x32c] sm:$0xff]
    %v886 = vld [vmem:[%s6 + $0x334] sm:$0xff]
    %v887 = vld [vmem:[%s6 + $0x33c] sm:$0xff]
    %v888 = vld [vmem:[%s6 + $0x344] sm:$0xf]
    %v889 = vld [vmem:[%s6 + $0x348] sm:$0xff]
    %v890 = vld [vmem:[%s6 + $0x350] sm:$0xff]
    %v891 = vld [vmem:[%s6 + $0x358] sm:$0xff]
    %v892 = vld [vmem:[%s6 + $0x360] sm:$0xf]
    %v893 = vld [vmem:[%s6 + $0x364] sm:$0xff]
    %v894 = vld [vmem:[%s6 + $0x36c] sm:$0xff]
    %v895 = vld [vmem:[%s6 + $0x374] sm:$0xff]
    %v896 = vld [vmem:[%s6 + $0x37c] sm:$0xf]
    %v897 = vld [vmem:[%s6 + $0x380] sm:$0xff]
    %v898 = vld [vmem:[%s6 + $0x388] sm:$0xff]
    %v899 = vld [vmem:[%s6 + $0x390] sm:$0xff]
    %v900 = vld [vmem:[%s6 + $0x398] sm:$0xf]
    %v901 = vld [vmem:[%s6 + $0x39c] sm:$0xff]
    %v902 = vld [vmem:[%s6 + $0x3a4] sm:$0xff]
    %v903 = vld [vmem:[%s6 + $0x3ac] sm:$0xff]
    %v904 = vld [vmem:[%s6 + $0x3b4] sm:$0xf]
    %v905 = vld [vmem:[%s6 + $0x3b8] sm:$0xff]
    %v906 = vld [vmem:[%s6 + $0x3c0] sm:$0xff]
    %v907 = vld [vmem:[%s6 + $0x3c8] sm:$0xff]
    %v908 = vld [vmem:[%s6 + $0x3d0] sm:$0xf]
    %v909 = vld [vmem:[%s6 + $0x3d4] sm:$0xff]
    %v910 = vld [vmem:[%s6 + $0x3dc] sm:$0xff]
    %v911 = vld [vmem:[%s6 + $0x3e4] sm:$0xff]
    %v912 = vld [vmem:[%s6 + $0x3ec] sm:$0xf]
    %v913 = vld [vmem:[%s6 + $0x3f0] sm:$0xff]
    %v914 = vld [vmem:[%s6 + $0x3f8] sm:$0xff]
    %v915 = vld [vmem:[%s6 + $0x400] sm:$0xff]
    %v916 = vld [vmem:[%s6 + $0x408] sm:$0xf]
    %v917 = vld [vmem:[%s6 + $0x40c] sm:$0xff]
    %v918 = vld [vmem:[%s6 + $0x414] sm:$0xff]
    %v919 = vld [vmem:[%s6 + $0x41c] sm:$0xff]
    %v920 = vld [vmem:[%s6 + $0x424] sm:$0xf]
    %v921 = vld [vmem:[%s6 + $0x428] sm:$0xff]
    %v922 = vld [vmem:[%s6 + $0x430] sm:$0xff]
    %v923 = vld [vmem:[%s6 + $0x438] sm:$0xff]
    %v924 = vld [vmem:[%s6 + $0x440] sm:$0xf]
    %v925 = vld [vmem:[%s6 + $0x444] sm:$0xff]
    %v926 = vld [vmem:[%s6 + $0x44c] sm:$0xff]
    %v927 = vld [vmem:[%s6 + $0x454] sm:$0xff]
    %v928 = vld [vmem:[%s6 + $0x45c] sm:$0xf]
    %v929 = vld [vmem:[%s6 + $0x460] sm:$0xff]
    %v930 = vld [vmem:[%s6 + $0x468] sm:$0xff]
    %v931 = vld [vmem:[%s6 + $0x470] sm:$0xff]
    %v932 = vld [vmem:[%s6 + $0x478] sm:$0xf]
    %v933 = vld [vmem:[%s6 + $0x47c] sm:$0xff]
    %v934 = vld [vmem:[%s6 + $0x484] sm:$0xff]
    %v935 = vld [vmem:[%s6 + $0x48c] sm:$0xff]
    %v936 = vld [vmem:[%s6 + $0x494] sm:$0xf]
    %v937 = vld [vmem:[%s6 + $0x498] sm:$0xff]
    %v938 = vld [vmem:[%s6 + $0x4a0] sm:$0xff]
    %v939 = vld [vmem:[%s6 + $0x4a8] sm:$0xff]
    %v940 = vld [vmem:[%s6 + $0x4b0] sm:$0xf]
    %v941 = vld [vmem:[%s6 + $0x4b4] sm:$0xff]
    %v942 = vld [vmem:[%s6 + $0x4bc] sm:$0xff]
    %v943 = vld [vmem:[%s6 + $0x4c4] sm:$0xff]
    %v944 = vld [vmem:[%s6 + $0x4cc] sm:$0xf]
    %v945 = vld [vmem:[%s6 + $0x4d0] sm:$0xff]
    %v946 = vld [vmem:[%s6 + $0x4d8] sm:$0xff]
    %v947 = vld [vmem:[%s6 + $0x4e0] sm:$0xff]
    %v948 = vld [vmem:[%s6 + $0x4e8] sm:$0xf]
    %v949 = vld [vmem:[%s6 + $0x4ec] sm:$0xff]
    %v950 = vld [vmem:[%s6 + $0x4f4] sm:$0xff]
    %v951 = vld [vmem:[%s6 + $0x4fc] sm:$0xff]
    %v952 = vld [vmem:[%s6 + $0x504] sm:$0xf]
    %v953 = vld [vmem:[%s6 + $0x508] sm:$0xff]
    %v954 = vld [vmem:[%s6 + $0x510] sm:$0xff]
    %v955 = vld [vmem:[%s6 + $0x518] sm:$0xff]
    %v956 = vld [vmem:[%s6 + $0x520] sm:$0xf]
    %v957 = vld [vmem:[%s6 + $0x524] sm:$0xff]
    %v958 = vld [vmem:[%s6 + $0x52c] sm:$0xff]
    %v959 = vld [vmem:[%s6 + $0x534] sm:$0xff]
    %v960 = vld [vmem:[%s6 + $0x53c] sm:$0xf]
    %v961 = vld [vmem:[%s6 + $0x540] sm:$0xff]
    %v962 = vld [vmem:[%s6 + $0x548] sm:$0xff]
    %v963 = vld [vmem:[%s6 + $0x550] sm:$0xff]
    %v964 = vld [vmem:[%s6 + $0x558] sm:$0xf]
    %v965 = vld [vmem:[%s6 + $0x55c] sm:$0xff]
    %v966 = vld [vmem:[%s6 + $0x564] sm:$0xff]
    %v967 = vld [vmem:[%s6 + $0x56c] sm:$0xff]
    %v968 = vld [vmem:[%s6 + $0x574] sm:$0xf]
    %v969 = vld [vmem:[%s6 + $0x578] sm:$0xff]
    %v970 = vld [vmem:[%s6 + $0x580] sm:$0xff]
    %v971 = vld [vmem:[%s6 + $0x588] sm:$0xff]
    %v972 = vld [vmem:[%s6 + $0x590] sm:$0xf]
    %v973 = vld [vmem:[%s6 + $0x594] sm:$0xff]
    %v974 = vld [vmem:[%s6 + $0x59c] sm:$0xff]
    %v975 = vld [vmem:[%s6 + $0x5a4] sm:$0xff]
    %v976 = vld [vmem:[%s6 + $0x5ac] sm:$0xf]
    %v977 = vld [vmem:[%s6 + $0x5b0] sm:$0xff]
    %v978 = vld [vmem:[%s6 + $0x5b8] sm:$0xff]
    %v979 = vld [vmem:[%s6 + $0x5c0] sm:$0xff]
    %v980 = vld [vmem:[%s6 + $0x5c8] sm:$0xf]
    %v981 = vld [vmem:[%s6 + $0x5cc] sm:$0xff]
    %v982 = vld [vmem:[%s6 + $0x5d4] sm:$0xff]
    %v983 = vld [vmem:[%s6 + $0x5dc] sm:$0xff]
    %v984 = vld [vmem:[%s6 + $0x5e4] sm:$0xf]
    %v985 = vld [vmem:[%s6 + $0x5e8] sm:$0xff]
    %v986 = vld [vmem:[%s6 + $0x5f0] sm:$0xff]
    %v987 = vld [vmem:[%s6 + $0x5f8] sm:$0xff]
    %v988 = vld [vmem:[%s6 + $0x600] sm:$0xf]
    %v989 = vld [vmem:[%s6 + $0x604] sm:$0xff]
    %v990 = vld [vmem:[%s6 + $0x60c] sm:$0xff]
    %v991 = vld [vmem:[%s6 + $0x614] sm:$0xff]
    %v992 = vld [vmem:[%s6 + $0x61c] sm:$0xf]
    %v993 = vld [vmem:[%s6 + $0x620] sm:$0xff]
    %v994 = vld [vmem:[%s6 + $0x628] sm:$0xff]
    %v995 = vld [vmem:[%s6 + $0x630] sm:$0xff]
    %v996 = vld [vmem:[%s6 + $0x638] sm:$0xf]
    %v997 = vld [vmem:[%s6 + $0x63c] sm:$0xff]
    %v998 = vld [vmem:[%s6 + $0x644] sm:$0xff]
    %v999 = vld [vmem:[%s6 + $0x64c] sm:$0xff]
    %v1000 = vld [vmem:[%s6 + $0x654] sm:$0xf]
    %v1001 = vld [vmem:[%s6 + $0x658] sm:$0xff]
    %v1002 = vld [vmem:[%s6 + $0x660] sm:$0xff]
    %v1003 = vld [vmem:[%s6 + $0x668] sm:$0xff]
    %v1004 = vld [vmem:[%s6 + $0x670] sm:$0xf]
    %v1005 = vld [vmem:[%s6 + $0x674] sm:$0xff]
    %v1006 = vld [vmem:[%s6 + $0x67c] sm:$0xff]
    %v1007 = vld [vmem:[%s6 + $0x684] sm:$0xff]
    %v1008 = vld [vmem:[%s6 + $0x68c] sm:$0xf]
    %v1009 = vld [vmem:[%s6 + $0x690] sm:$0xff]
    %v1010 = vld [vmem:[%s6 + $0x698] sm:$0xff]
    %v1011 = vld [vmem:[%s6 + $0x6a0] sm:$0xff]
    %v1012 = vld [vmem:[%s6 + $0x6a8] sm:$0xf]
    %v1013 = vld [vmem:[%s6 + $0x6ac] sm:$0xff]
    %v1014 = vld [vmem:[%s6 + $0x6b4] sm:$0xff]
    %v1015 = vld [vmem:[%s6 + $0x6bc] sm:$0xff]
    %v1016 = vld [vmem:[%s6 + $0x6c4] sm:$0xf]
    %v1017 = vld [vmem:[%s6 + $0x6c8] sm:$0xff]
    %v1018 = vld [vmem:[%s6 + $0x6d0] sm:$0xff]
    %v1019 = vld [vmem:[%s6 + $0x6d8] sm:$0xff]
    %v1020 = vld [vmem:[%s6 + $0x6e0] sm:$0xf]
    %v1021 = vld [vmem:[%s6 + $0x6e4] sm:$0xff]
    %v1022 = vld [vmem:[%s6 + $0x6ec] sm:$0xff]
    %v1023 = vld [vmem:[%s6 + $0x6f4] sm:$0xff]
    %v1024 = vld [vmem:[%s6 + $0x6fc] sm:$0xf]
    %v1281 = vunpack.c.l.b16 %v769
    %v1282 = vunpack.c.h.b16 %v769
    %v1283 = vunpack.c.l.b16 %v770
    %v1284 = vunpack.c.h.b16 %v770
    %v1285 = vunpack.c.l.b16 %v771
    %v1286 = vunpack.c.h.b16 %v771
    %v1287 = vunpack.c.l.b16 %v772
    %v1288 = vunpack.c.l.b16 %v773
    %v1289 = vunpack.c.h.b16 %v773
    %v1290 = vunpack.c.l.b16 %v774
    %v1291 = vunpack.c.h.b16 %v774
    %v1292 = vunpack.c.l.b16 %v775
    %v1293 = vunpack.c.h.b16 %v775
    %v1294 = vunpack.c.l.b16 %v776
    %v1295 = vunpack.c.l.b16 %v777
    %v1296 = vunpack.c.h.b16 %v777
    %v1297 = vunpack.c.l.b16 %v778
    %v1298 = vunpack.c.h.b16 %v778
    %v1299 = vunpack.c.l.b16 %v779
    %v1300 = vunpack.c.h.b16 %v779
    %v1301 = vunpack.c.l.b16 %v780
    %v1302 = vunpack.c.l.b16 %v781
    %v1303 = vunpack.c.h.b16 %v781
    %v1304 = vunpack.c.l.b16 %v782
    %v1305 = vunpack.c.h.b16 %v782
    %v1306 = vunpack.c.l.b16 %v783
    %v1307 = vunpack.c.h.b16 %v783
    %v1308 = vunpack.c.l.b16 %v784
    %v1309 = vunpack.c.l.b16 %v785
    %v1310 = vunpack.c.h.b16 %v785
    %v1311 = vunpack.c.l.b16 %v786
    %v1312 = vunpack.c.h.b16 %v786
    %v1313 = vunpack.c.l.b16 %v787
    %v1314 = vunpack.c.h.b16 %v787
    %v1315 = vunpack.c.l.b16 %v788
    %v1316 = vunpack.c.l.b16 %v789
    %v1317 = vunpack.c.h.b16 %v789
    %v1318 = vunpack.c.l.b16 %v790
    %v1319 = vunpack.c.h.b16 %v790
    %v1320 = vunpack.c.l.b16 %v791
    %v1321 = vunpack.c.h.b16 %v791
    %v1322 = vunpack.c.l.b16 %v792
    %v1323 = vunpack.c.l.b16 %v793
    %v1324 = vunpack.c.h.b16 %v793
    %v1325 = vunpack.c.l.b16 %v794
    %v1326 = vunpack.c.h.b16 %v794
    %v1327 = vunpack.c.l.b16 %v795
    %v1328 = vunpack.c.h.b16 %v795
    %v1329 = vunpack.c.l.b16 %v796
    %v1330 = vunpack.c.l.b16 %v797
    %v1331 = vunpack.c.h.b16 %v797
    %v1332 = vunpack.c.l.b16 %v798
    %v1333 = vunpack.c.h.b16 %v798
    %v1334 = vunpack.c.l.b16 %v799
    %v1335 = vunpack.c.h.b16 %v799
    %v1336 = vunpack.c.l.b16 %v800
    %v1337 = vunpack.c.l.b16 %v801
    %v1338 = vunpack.c.h.b16 %v801
    %v1339 = vunpack.c.l.b16 %v802
    %v1340 = vunpack.c.h.b16 %v802
    %v1341 = vunpack.c.l.b16 %v803
    %v1342 = vunpack.c.h.b16 %v803
    %v1343 = vunpack.c.l.b16 %v804
    %v1344 = vunpack.c.l.b16 %v805
    %v1345 = vunpack.c.h.b16 %v805
    %v1346 = vunpack.c.l.b16 %v806
    %v1347 = vunpack.c.h.b16 %v806
    %v1348 = vunpack.c.l.b16 %v807
    %v1349 = vunpack.c.h.b16 %v807
    %v1350 = vunpack.c.l.b16 %v808
    %v1351 = vunpack.c.l.b16 %v809
    %v1352 = vunpack.c.h.b16 %v809
    %v1353 = vunpack.c.l.b16 %v810
    %v1354 = vunpack.c.h.b16 %v810
    %v1355 = vunpack.c.l.b16 %v811
    %v1356 = vunpack.c.h.b16 %v811
    %v1357 = vunpack.c.l.b16 %v812
    %v1358 = vunpack.c.l.b16 %v813
    %v1359 = vunpack.c.h.b16 %v813
    %v1360 = vunpack.c.l.b16 %v814
    %v1361 = vunpack.c.h.b16 %v814
    %v1362 = vunpack.c.l.b16 %v815
    %v1363 = vunpack.c.h.b16 %v815
    %v1364 = vunpack.c.l.b16 %v816
    %v1365 = vunpack.c.l.b16 %v817
    %v1366 = vunpack.c.h.b16 %v817
    %v1367 = vunpack.c.l.b16 %v818
    %v1368 = vunpack.c.h.b16 %v818
    %v1369 = vunpack.c.l.b16 %v819
    %v1370 = vunpack.c.h.b16 %v819
    %v1371 = vunpack.c.l.b16 %v820
    %v1372 = vunpack.c.l.b16 %v821
    %v1373 = vunpack.c.h.b16 %v821
    %v1374 = vunpack.c.l.b16 %v822
    %v1375 = vunpack.c.h.b16 %v822
    %v1376 = vunpack.c.l.b16 %v823
    %v1377 = vunpack.c.h.b16 %v823
    %v1378 = vunpack.c.l.b16 %v824
    %v1379 = vunpack.c.l.b16 %v825
    %v1380 = vunpack.c.h.b16 %v825
    %v1381 = vunpack.c.l.b16 %v826
    %v1382 = vunpack.c.h.b16 %v826
    %v1383 = vunpack.c.l.b16 %v827
    %v1384 = vunpack.c.h.b16 %v827
    %v1385 = vunpack.c.l.b16 %v828
    %v1386 = vunpack.c.l.b16 %v829
    %v1387 = vunpack.c.h.b16 %v829
    %v1388 = vunpack.c.l.b16 %v830
    %v1389 = vunpack.c.h.b16 %v830
    %v1390 = vunpack.c.l.b16 %v831
    %v1391 = vunpack.c.h.b16 %v831
    %v1392 = vunpack.c.l.b16 %v832
    %v1393 = vunpack.c.l.b16 %v833
    %v1394 = vunpack.c.h.b16 %v833
    %v1395 = vunpack.c.l.b16 %v834
    %v1396 = vunpack.c.h.b16 %v834
    %v1397 = vunpack.c.l.b16 %v835
    %v1398 = vunpack.c.h.b16 %v835
    %v1399 = vunpack.c.l.b16 %v836
    %v1400 = vunpack.c.l.b16 %v837
    %v1401 = vunpack.c.h.b16 %v837
    %v1402 = vunpack.c.l.b16 %v838
    %v1403 = vunpack.c.h.b16 %v838
    %v1404 = vunpack.c.l.b16 %v839
    %v1405 = vunpack.c.h.b16 %v839
    %v1406 = vunpack.c.l.b16 %v840
    %v1407 = vunpack.c.l.b16 %v841
    %v1408 = vunpack.c.h.b16 %v841
    %v1409 = vunpack.c.l.b16 %v842
    %v1410 = vunpack.c.h.b16 %v842
    %v1411 = vunpack.c.l.b16 %v843
    %v1412 = vunpack.c.h.b16 %v843
    %v1413 = vunpack.c.l.b16 %v844
    %v1414 = vunpack.c.l.b16 %v845
    %v1415 = vunpack.c.h.b16 %v845
    %v1416 = vunpack.c.l.b16 %v846
    %v1417 = vunpack.c.h.b16 %v846
    %v1418 = vunpack.c.l.b16 %v847
    %v1419 = vunpack.c.h.b16 %v847
    %v1420 = vunpack.c.l.b16 %v848
    %v1421 = vunpack.c.l.b16 %v849
    %v1422 = vunpack.c.h.b16 %v849
    %v1423 = vunpack.c.l.b16 %v850
    %v1424 = vunpack.c.h.b16 %v850
    %v1425 = vunpack.c.l.b16 %v851
    %v1426 = vunpack.c.h.b16 %v851
    %v1427 = vunpack.c.l.b16 %v852
    %v1428 = vunpack.c.l.b16 %v853
    %v1429 = vunpack.c.h.b16 %v853
    %v1430 = vunpack.c.l.b16 %v854
    %v1431 = vunpack.c.h.b16 %v854
    %v1432 = vunpack.c.l.b16 %v855
    %v1433 = vunpack.c.h.b16 %v855
    %v1434 = vunpack.c.l.b16 %v856
    %v1435 = vunpack.c.l.b16 %v857
    %v1436 = vunpack.c.h.b16 %v857
    %v1437 = vunpack.c.l.b16 %v858
    %v1438 = vunpack.c.h.b16 %v858
    %v1439 = vunpack.c.l.b16 %v859
    %v1440 = vunpack.c.h.b16 %v859
    %v1441 = vunpack.c.l.b16 %v860
    %v1442 = vunpack.c.l.b16 %v861
    %v1443 = vunpack.c.h.b16 %v861
    %v1444 = vunpack.c.l.b16 %v862
    %v1445 = vunpack.c.h.b16 %v862
    %v1446 = vunpack.c.l.b16 %v863
    %v1447 = vunpack.c.h.b16 %v863
    %v1448 = vunpack.c.l.b16 %v864
    %v1449 = vunpack.c.l.b16 %v865
    %v1450 = vunpack.c.h.b16 %v865
    %v1451 = vunpack.c.l.b16 %v866
    %v1452 = vunpack.c.h.b16 %v866
    %v1453 = vunpack.c.l.b16 %v867
    %v1454 = vunpack.c.h.b16 %v867
    %v1455 = vunpack.c.l.b16 %v868
    %v1456 = vunpack.c.l.b16 %v869
    %v1457 = vunpack.c.h.b16 %v869
    %v1458 = vunpack.c.l.b16 %v870
    %v1459 = vunpack.c.h.b16 %v870
    %v1460 = vunpack.c.l.b16 %v871
    %v1461 = vunpack.c.h.b16 %v871
    %v1462 = vunpack.c.l.b16 %v872
    %v1463 = vunpack.c.l.b16 %v873
    %v1464 = vunpack.c.h.b16 %v873
    %v1465 = vunpack.c.l.b16 %v874
    %v1466 = vunpack.c.h.b16 %v874
    %v1467 = vunpack.c.l.b16 %v875
    %v1468 = vunpack.c.h.b16 %v875
    %v1469 = vunpack.c.l.b16 %v876
    %v1470 = vunpack.c.l.b16 %v877
    %v1471 = vunpack.c.h.b16 %v877
    %v1472 = vunpack.c.l.b16 %v878
    %v1473 = vunpack.c.h.b16 %v878
    %v1474 = vunpack.c.l.b16 %v879
    %v1475 = vunpack.c.h.b16 %v879
    %v1476 = vunpack.c.l.b16 %v880
    %v1477 = vunpack.c.l.b16 %v881
    %v1478 = vunpack.c.h.b16 %v881
    %v1479 = vunpack.c.l.b16 %v882
    %v1480 = vunpack.c.h.b16 %v882
    %v1481 = vunpack.c.l.b16 %v883
    %v1482 = vunpack.c.h.b16 %v883
    %v1483 = vunpack.c.l.b16 %v884
    %v1484 = vunpack.c.l.b16 %v885
    %v1485 = vunpack.c.h.b16 %v885
    %v1486 = vunpack.c.l.b16 %v886
    %v1487 = vunpack.c.h.b16 %v886
    %v1488 = vunpack.c.l.b16 %v887
    %v1489 = vunpack.c.h.b16 %v887
    %v1490 = vunpack.c.l.b16 %v888
    %v1491 = vunpack.c.l.b16 %v889
    %v1492 = vunpack.c.h.b16 %v889
    %v1493 = vunpack.c.l.b16 %v890
    %v1494 = vunpack.c.h.b16 %v890
    %v1495 = vunpack.c.l.b16 %v891
    %v1496 = vunpack.c.h.b16 %v891
    %v1497 = vunpack.c.l.b16 %v892
    %v1498 = vunpack.c.l.b16 %v893
    %v1499 = vunpack.c.h.b16 %v893
    %v1500 = vunpack.c.l.b16 %v894
    %v1501 = vunpack.c.h.b16 %v894
    %v1502 = vunpack.c.l.b16 %v895
    %v1503 = vunpack.c.h.b16 %v895
    %v1504 = vunpack.c.l.b16 %v896
    %v1505 = vunpack.c.l.b16 %v897
    %v1506 = vunpack.c.h.b16 %v897
    %v1507 = vunpack.c.l.b16 %v898
    %v1508 = vunpack.c.h.b16 %v898
    %v1509 = vunpack.c.l.b16 %v899
    %v1510 = vunpack.c.h.b16 %v899
    %v1511 = vunpack.c.l.b16 %v900
    %v1512 = vunpack.c.l.b16 %v901
    %v1513 = vunpack.c.h.b16 %v901
    %v1514 = vunpack.c.l.b16 %v902
    %v1515 = vunpack.c.h.b16 %v902
    %v1516 = vunpack.c.l.b16 %v903
    %v1517 = vunpack.c.h.b16 %v903
    %v1518 = vunpack.c.l.b16 %v904
    %v1519 = vunpack.c.l.b16 %v905
    %v1520 = vunpack.c.h.b16 %v905
    %v1521 = vunpack.c.l.b16 %v906
    %v1522 = vunpack.c.h.b16 %v906
    %v1523 = vunpack.c.l.b16 %v907
    %v1524 = vunpack.c.h.b16 %v907
    %v1525 = vunpack.c.l.b16 %v908
    %v1526 = vunpack.c.l.b16 %v909
    %v1527 = vunpack.c.h.b16 %v909
    %v1528 = vunpack.c.l.b16 %v910
    %v1529 = vunpack.c.h.b16 %v910
    %v1530 = vunpack.c.l.b16 %v911
    %v1531 = vunpack.c.h.b16 %v911
    %v1532 = vunpack.c.l.b16 %v912
    %v1533 = vunpack.c.l.b16 %v913
    %v1534 = vunpack.c.h.b16 %v913
    %v1535 = vunpack.c.l.b16 %v914
    %v1536 = vunpack.c.h.b16 %v914
    %v1537 = vunpack.c.l.b16 %v915
    %v1538 = vunpack.c.h.b16 %v915
    %v1539 = vunpack.c.l.b16 %v916
    %v1540 = vunpack.c.l.b16 %v917
    %v1541 = vunpack.c.h.b16 %v917
    %v1542 = vunpack.c.l.b16 %v918
    %v1543 = vunpack.c.h.b16 %v918
    %v1544 = vunpack.c.l.b16 %v919
    %v1545 = vunpack.c.h.b16 %v919
    %v1546 = vunpack.c.l.b16 %v920
    %v1547 = vunpack.c.l.b16 %v921
    %v1548 = vunpack.c.h.b16 %v921
    %v1549 = vunpack.c.l.b16 %v922
    %v1550 = vunpack.c.h.b16 %v922
    %v1551 = vunpack.c.l.b16 %v923
    %v1552 = vunpack.c.h.b16 %v923
    %v1553 = vunpack.c.l.b16 %v924
    %v1554 = vunpack.c.l.b16 %v925
    %v1555 = vunpack.c.h.b16 %v925
    %v1556 = vunpack.c.l.b16 %v926
    %v1557 = vunpack.c.h.b16 %v926
    %v1558 = vunpack.c.l.b16 %v927
    %v1559 = vunpack.c.h.b16 %v927
    %v1560 = vunpack.c.l.b16 %v928
    %v1561 = vunpack.c.l.b16 %v929
    %v1562 = vunpack.c.h.b16 %v929
    %v1563 = vunpack.c.l.b16 %v930
    %v1564 = vunpack.c.h.b16 %v930
    %v1565 = vunpack.c.l.b16 %v931
    %v1566 = vunpack.c.h.b16 %v931
    %v1567 = vunpack.c.l.b16 %v932
    %v1568 = vunpack.c.l.b16 %v933
    %v1569 = vunpack.c.h.b16 %v933
    %v1570 = vunpack.c.l.b16 %v934
    %v1571 = vunpack.c.h.b16 %v934
    %v1572 = vunpack.c.l.b16 %v935
    %v1573 = vunpack.c.h.b16 %v935
    %v1574 = vunpack.c.l.b16 %v936
    %v1575 = vunpack.c.l.b16 %v937
    %v1576 = vunpack.c.h.b16 %v937
    %v1577 = vunpack.c.l.b16 %v938
    %v1578 = vunpack.c.h.b16 %v938
    %v1579 = vunpack.c.l.b16 %v939
    %v1580 = vunpack.c.h.b16 %v939
    %v1581 = vunpack.c.l.b16 %v940
    %v1582 = vunpack.c.l.b16 %v941
    %v1583 = vunpack.c.h.b16 %v941
    %v1584 = vunpack.c.l.b16 %v942
    %v1585 = vunpack.c.h.b16 %v942
    %v1586 = vunpack.c.l.b16 %v943
    %v1587 = vunpack.c.h.b16 %v943
    %v1588 = vunpack.c.l.b16 %v944
    %v1589 = vunpack.c.l.b16 %v945
    %v1590 = vunpack.c.h.b16 %v945
    %v1591 = vunpack.c.l.b16 %v946
    %v1592 = vunpack.c.h.b16 %v946
    %v1593 = vunpack.c.l.b16 %v947
    %v1594 = vunpack.c.h.b16 %v947
    %v1595 = vunpack.c.l.b16 %v948
    %v1596 = vunpack.c.l.b16 %v949
    %v1597 = vunpack.c.h.b16 %v949
    %v1598 = vunpack.c.l.b16 %v950
    %v1599 = vunpack.c.h.b16 %v950
    %v1600 = vunpack.c.l.b16 %v951
    %v1601 = vunpack.c.h.b16 %v951
    %v1602 = vunpack.c.l.b16 %v952
    %v1603 = vunpack.c.l.b16 %v953
    %v1604 = vunpack.c.h.b16 %v953
    %v1605 = vunpack.c.l.b16 %v954
    %v1606 = vunpack.c.h.b16 %v954
    %v1607 = vunpack.c.l.b16 %v955
    %v1608 = vunpack.c.h.b16 %v955
    %v1609 = vunpack.c.l.b16 %v956
    %v1610 = vunpack.c.l.b16 %v957
    %v1611 = vunpack.c.h.b16 %v957
    %v1612 = vunpack.c.l.b16 %v958
    %v1613 = vunpack.c.h.b16 %v958
    %v1614 = vunpack.c.l.b16 %v959
    %v1615 = vunpack.c.h.b16 %v959
    %v1616 = vunpack.c.l.b16 %v960
    %v1617 = vunpack.c.l.b16 %v961
    %v1618 = vunpack.c.h.b16 %v961
    %v1619 = vunpack.c.l.b16 %v962
    %v1620 = vunpack.c.h.b16 %v962
    %v1621 = vunpack.c.l.b16 %v963
    %v1622 = vunpack.c.h.b16 %v963
    %v1623 = vunpack.c.l.b16 %v964
    %v1624 = vunpack.c.l.b16 %v965
    %v1625 = vunpack.c.h.b16 %v965
    %v1626 = vunpack.c.l.b16 %v966
    %v1627 = vunpack.c.h.b16 %v966
    %v1628 = vunpack.c.l.b16 %v967
    %v1629 = vunpack.c.h.b16 %v967
    %v1630 = vunpack.c.l.b16 %v968
    %v1631 = vunpack.c.l.b16 %v969
    %v1632 = vunpack.c.h.b16 %v969
    %v1633 = vunpack.c.l.b16 %v970
    %v1634 = vunpack.c.h.b16 %v970
    %v1635 = vunpack.c.l.b16 %v971
    %v1636 = vunpack.c.h.b16 %v971
    %v1637 = vunpack.c.l.b16 %v972
    %v1638 = vunpack.c.l.b16 %v973
    %v1639 = vunpack.c.h.b16 %v973
    %v1640 = vunpack.c.l.b16 %v974
    %v1641 = vunpack.c.h.b16 %v974
    %v1642 = vunpack.c.l.b16 %v975
    %v1643 = vunpack.c.h.b16 %v975
    %v1644 = vunpack.c.l.b16 %v976
    %v1645 = vunpack.c.l.b16 %v977
    %v1646 = vunpack.c.h.b16 %v977
    %v1647 = vunpack.c.l.b16 %v978
    %v1648 = vunpack.c.h.b16 %v978
    %v1649 = vunpack.c.l.b16 %v979
    %v1650 = vunpack.c.h.b16 %v979
    %v1651 = vunpack.c.l.b16 %v980
    %v1652 = vunpack.c.l.b16 %v981
    %v1653 = vunpack.c.h.b16 %v981
    %v1654 = vunpack.c.l.b16 %v982
    %v1655 = vunpack.c.h.b16 %v982
    %v1656 = vunpack.c.l.b16 %v983
    %v1657 = vunpack.c.h.b16 %v983
    %v1658 = vunpack.c.l.b16 %v984
    %v1659 = vunpack.c.l.b16 %v985
    %v1660 = vunpack.c.h.b16 %v985
    %v1661 = vunpack.c.l.b16 %v986
    %v1662 = vunpack.c.h.b16 %v986
    %v1663 = vunpack.c.l.b16 %v987
    %v1664 = vunpack.c.h.b16 %v987
    %v1665 = vunpack.c.l.b16 %v988
    %v1666 = vunpack.c.l.b16 %v989
    %v1667 = vunpack.c.h.b16 %v989
    %v1668 = vunpack.c.l.b16 %v990
    %v1669 = vunpack.c.h.b16 %v990
    %v1670 = vunpack.c.l.b16 %v991
    %v1671 = vunpack.c.h.b16 %v991
    %v1672 = vunpack.c.l.b16 %v992
    %v1673 = vunpack.c.l.b16 %v993
    %v1674 = vunpack.c.h.b16 %v993
    %v1675 = vunpack.c.l.b16 %v994
    %v1676 = vunpack.c.h.b16 %v994
    %v1677 = vunpack.c.l.b16 %v995
    %v1678 = vunpack.c.h.b16 %v995
    %v1679 = vunpack.c.l.b16 %v996
    %v1680 = vunpack.c.l.b16 %v997
    %v1681 = vunpack.c.h.b16 %v997
    %v1682 = vunpack.c.l.b16 %v998
    %v1683 = vunpack.c.h.b16 %v998
    %v1684 = vunpack.c.l.b16 %v999
    %v1685 = vunpack.c.h.b16 %v999
    %v1686 = vunpack.c.l.b16 %v1000
    %v1687 = vunpack.c.l.b16 %v1001
    %v1688 = vunpack.c.h.b16 %v1001
    %v1689 = vunpack.c.l.b16 %v1002
    %v1690 = vunpack.c.h.b16 %v1002
    %v1691 = vunpack.c.l.b16 %v1003
    %v1692 = vunpack.c.h.b16 %v1003
    %v1693 = vunpack.c.l.b16 %v1004
    %v1694 = vunpack.c.l.b16 %v1005
    %v1695 = vunpack.c.h.b16 %v1005
    %v1696 = vunpack.c.l.b16 %v1006
    %v1697 = vunpack.c.h.b16 %v1006
    %v1698 = vunpack.c.l.b16 %v1007
    %v1699 = vunpack.c.h.b16 %v1007
    %v1700 = vunpack.c.l.b16 %v1008
    %v1701 = vunpack.c.l.b16 %v1009
    %v1702 = vunpack.c.h.b16 %v1009
    %v1703 = vunpack.c.l.b16 %v1010
    %v1704 = vunpack.c.h.b16 %v1010
    %v1705 = vunpack.c.l.b16 %v1011
    %v1706 = vunpack.c.h.b16 %v1011
    %v1707 = vunpack.c.l.b16 %v1012
    %v1708 = vunpack.c.l.b16 %v1013
    %v1709 = vunpack.c.h.b16 %v1013
    %v1710 = vunpack.c.l.b16 %v1014
    %v1711 = vunpack.c.h.b16 %v1014
    %v1712 = vunpack.c.l.b16 %v1015
    %v1713 = vunpack.c.h.b16 %v1015
    %v1714 = vunpack.c.l.b16 %v1016
    %v1715 = vunpack.c.l.b16 %v1017
    %v1716 = vunpack.c.h.b16 %v1017
    %v1717 = vunpack.c.l.b16 %v1018
    %v1718 = vunpack.c.h.b16 %v1018
    %v1719 = vunpack.c.l.b16 %v1019
    %v1720 = vunpack.c.h.b16 %v1019
    %v1721 = vunpack.c.l.b16 %v1020
    %v1722 = vunpack.c.l.b16 %v1021
    %v1723 = vunpack.c.h.b16 %v1021
    %v1724 = vunpack.c.l.b16 %v1022
    %v1725 = vunpack.c.h.b16 %v1022
    %v1726 = vunpack.c.l.b16 %v1023
    %v1727 = vunpack.c.h.b16 %v1023
    %v1728 = vunpack.c.l.b16 %v1024
    %v1729 = vpack.c.b16 %v1288, %v1281
    %v1730 = vpack.c.b16 %v1289, %v1282
    %v1731 = vpack.c.b16 %v1290, %v1283
    %v1732 = vpack.c.b16 %v1291, %v1284
    %v1733 = vpack.c.b16 %v1292, %v1285
    %v1734 = vpack.c.b16 %v1293, %v1286
    %v1735 = vpack.c.b16 %v1294, %v1287
    %v1736 = vpack.c.b16 %v1302, %v1295
    %v1737 = vpack.c.b16 %v1303, %v1296
    %v1738 = vpack.c.b16 %v1304, %v1297
    %v1739 = vpack.c.b16 %v1305, %v1298
    %v1740 = vpack.c.b16 %v1306, %v1299
    %v1741 = vpack.c.b16 %v1307, %v1300
    %v1742 = vpack.c.b16 %v1308, %v1301
    %v1743 = vpack.c.b16 %v1316, %v1309
    %v1744 = vpack.c.b16 %v1317, %v1310
    %v1745 = vpack.c.b16 %v1318, %v1311
    %v1746 = vpack.c.b16 %v1319, %v1312
    %v1747 = vpack.c.b16 %v1320, %v1313
    %v1748 = vpack.c.b16 %v1321, %v1314
    %v1749 = vpack.c.b16 %v1322, %v1315
    %v1750 = vpack.c.b16 %v1330, %v1323
    %v1751 = vpack.c.b16 %v1331, %v1324
    %v1752 = vpack.c.b16 %v1332, %v1325
    %v1753 = vpack.c.b16 %v1333, %v1326
    %v1754 = vpack.c.b16 %v1334, %v1327
    %v1755 = vpack.c.b16 %v1335, %v1328
    %v1756 = vpack.c.b16 %v1336, %v1329
    %v1757 = vpack.c.b16 %v1344, %v1337
    %v1758 = vpack.c.b16 %v1345, %v1338
    %v1759 = vpack.c.b16 %v1346, %v1339
    %v1760 = vpack.c.b16 %v1347, %v1340
    %v1761 = vpack.c.b16 %v1348, %v1341
    %v1762 = vpack.c.b16 %v1349, %v1342
    %v1763 = vpack.c.b16 %v1350, %v1343
    %v1764 = vpack.c.b16 %v1358, %v1351
    %v1765 = vpack.c.b16 %v1359, %v1352
    %v1766 = vpack.c.b16 %v1360, %v1353
    %v1767 = vpack.c.b16 %v1361, %v1354
    %v1768 = vpack.c.b16 %v1362, %v1355
    %v1769 = vpack.c.b16 %v1363, %v1356
    %v1770 = vpack.c.b16 %v1364, %v1357
    %v1771 = vpack.c.b16 %v1372, %v1365
    %v1772 = vpack.c.b16 %v1373, %v1366
    %v1773 = vpack.c.b16 %v1374, %v1367
    %v1774 = vpack.c.b16 %v1375, %v1368
    %v1775 = vpack.c.b16 %v1376, %v1369
    %v1776 = vpack.c.b16 %v1377, %v1370
    %v1777 = vpack.c.b16 %v1378, %v1371
    %v1778 = vpack.c.b16 %v1386, %v1379
    %v1779 = vpack.c.b16 %v1387, %v1380
    %v1780 = vpack.c.b16 %v1388, %v1381
    %v1781 = vpack.c.b16 %v1389, %v1382
    %v1782 = vpack.c.b16 %v1390, %v1383
    %v1783 = vpack.c.b16 %v1391, %v1384
    %v1784 = vpack.c.b16 %v1392, %v1385
    %v1785 = vpack.c.b16 %v1400, %v1393
    %v1786 = vpack.c.b16 %v1401, %v1394
    %v1787 = vpack.c.b16 %v1402, %v1395
    %v1788 = vpack.c.b16 %v1403, %v1396
    %v1789 = vpack.c.b16 %v1404, %v1397
    %v1790 = vpack.c.b16 %v1405, %v1398
    %v1791 = vpack.c.b16 %v1406, %v1399
    %v1792 = vpack.c.b16 %v1414, %v1407
    %v1793 = vpack.c.b16 %v1415, %v1408
    %v1794 = vpack.c.b16 %v1416, %v1409
    %v1795 = vpack.c.b16 %v1417, %v1410
    %v1796 = vpack.c.b16 %v1418, %v1411
    %v1797 = vpack.c.b16 %v1419, %v1412
    %v1798 = vpack.c.b16 %v1420, %v1413
    %v1799 = vpack.c.b16 %v1428, %v1421
    %v1800 = vpack.c.b16 %v1429, %v1422
    %v1801 = vpack.c.b16 %v1430, %v1423
    %v1802 = vpack.c.b16 %v1431, %v1424
    %v1803 = vpack.c.b16 %v1432, %v1425
    %v1804 = vpack.c.b16 %v1433, %v1426
    %v1805 = vpack.c.b16 %v1434, %v1427
    %v1806 = vpack.c.b16 %v1442, %v1435
    %v1807 = vpack.c.b16 %v1443, %v1436
    %v1808 = vpack.c.b16 %v1444, %v1437
    %v1809 = vpack.c.b16 %v1445, %v1438
    %v1810 = vpack.c.b16 %v1446, %v1439
    %v1811 = vpack.c.b16 %v1447, %v1440
    %v1812 = vpack.c.b16 %v1448, %v1441
    %v1813 = vpack.c.b16 %v1456, %v1449
    %v1814 = vpack.c.b16 %v1457, %v1450
    %v1815 = vpack.c.b16 %v1458, %v1451
    %v1816 = vpack.c.b16 %v1459, %v1452
    %v1817 = vpack.c.b16 %v1460, %v1453
    %v1818 = vpack.c.b16 %v1461, %v1454
    %v1819 = vpack.c.b16 %v1462, %v1455
    %v1820 = vpack.c.b16 %v1470, %v1463
    %v1821 = vpack.c.b16 %v1471, %v1464
    %v1822 = vpack.c.b16 %v1472, %v1465
    %v1823 = vpack.c.b16 %v1473, %v1466
    %v1824 = vpack.c.b16 %v1474, %v1467
    %v1825 = vpack.c.b16 %v1475, %v1468
    %v1826 = vpack.c.b16 %v1476, %v1469
    %v1827 = vpack.c.b16 %v1484, %v1477
    %v1828 = vpack.c.b16 %v1485, %v1478
    %v1829 = vpack.c.b16 %v1486, %v1479
    %v1830 = vpack.c.b16 %v1487, %v1480
    %v1831 = vpack.c.b16 %v1488, %v1481
    %v1832 = vpack.c.b16 %v1489, %v1482
    %v1833 = vpack.c.b16 %v1490, %v1483
    %v1834 = vpack.c.b16 %v1498, %v1491
    %v1835 = vpack.c.b16 %v1499, %v1492
    %v1836 = vpack.c.b16 %v1500, %v1493
    %v1837 = vpack.c.b16 %v1501, %v1494
    %v1838 = vpack.c.b16 %v1502, %v1495
    %v1839 = vpack.c.b16 %v1503, %v1496
    %v1840 = vpack.c.b16 %v1504, %v1497
    %v1841 = vpack.c.b16 %v1512, %v1505
    %v1842 = vpack.c.b16 %v1513, %v1506
    %v1843 = vpack.c.b16 %v1514, %v1507
    %v1844 = vpack.c.b16 %v1515, %v1508
    %v1845 = vpack.c.b16 %v1516, %v1509
    %v1846 = vpack.c.b16 %v1517, %v1510
    %v1847 = vpack.c.b16 %v1518, %v1511
    %v1848 = vpack.c.b16 %v1526, %v1519
    %v1849 = vpack.c.b16 %v1527, %v1520
    %v1850 = vpack.c.b16 %v1528, %v1521
    %v1851 = vpack.c.b16 %v1529, %v1522
    %v1852 = vpack.c.b16 %v1530, %v1523
    %v1853 = vpack.c.b16 %v1531, %v1524
    %v1854 = vpack.c.b16 %v1532, %v1525
    %v1855 = vpack.c.b16 %v1540, %v1533
    %v1856 = vpack.c.b16 %v1541, %v1534
    %v1857 = vpack.c.b16 %v1542, %v1535
    %v1858 = vpack.c.b16 %v1543, %v1536
    %v1859 = vpack.c.b16 %v1544, %v1537
    %v1860 = vpack.c.b16 %v1545, %v1538
    %v1861 = vpack.c.b16 %v1546, %v1539
    %v1862 = vpack.c.b16 %v1554, %v1547
    %v1863 = vpack.c.b16 %v1555, %v1548
    %v1864 = vpack.c.b16 %v1556, %v1549
    %v1865 = vpack.c.b16 %v1557, %v1550
    %v1866 = vpack.c.b16 %v1558, %v1551
    %v1867 = vpack.c.b16 %v1559, %v1552
    %v1868 = vpack.c.b16 %v1560, %v1553
    %v1869 = vpack.c.b16 %v1568, %v1561
    %v1870 = vpack.c.b16 %v1569, %v1562
    %v1871 = vpack.c.b16 %v1570, %v1563
    %v1872 = vpack.c.b16 %v1571, %v1564
    %v1873 = vpack.c.b16 %v1572, %v1565
    %v1874 = vpack.c.b16 %v1573, %v1566
    %v1875 = vpack.c.b16 %v1574, %v1567
    %v1876 = vpack.c.b16 %v1582, %v1575
    %v1877 = vpack.c.b16 %v1583, %v1576
    %v1878 = vpack.c.b16 %v1584, %v1577
    %v1879 = vpack.c.b16 %v1585, %v1578
    %v1880 = vpack.c.b16 %v1586, %v1579
    %v1881 = vpack.c.b16 %v1587, %v1580
    %v1882 = vpack.c.b16 %v1588, %v1581
    %v1883 = vpack.c.b16 %v1596, %v1589
    %v1884 = vpack.c.b16 %v1597, %v1590
    %v1885 = vpack.c.b16 %v1598, %v1591
    %v1886 = vpack.c.b16 %v1599, %v1592
    %v1887 = vpack.c.b16 %v1600, %v1593
    %v1888 = vpack.c.b16 %v1601, %v1594
    %v1889 = vpack.c.b16 %v1602, %v1595
    %v1890 = vpack.c.b16 %v1610, %v1603
    %v1891 = vpack.c.b16 %v1611, %v1604
    %v1892 = vpack.c.b16 %v1612, %v1605
    %v1893 = vpack.c.b16 %v1613, %v1606
    %v1894 = vpack.c.b16 %v1614, %v1607
    %v1895 = vpack.c.b16 %v1615, %v1608
    %v1896 = vpack.c.b16 %v1616, %v1609
    %v1897 = vpack.c.b16 %v1624, %v1617
    %v1898 = vpack.c.b16 %v1625, %v1618
    %v1899 = vpack.c.b16 %v1626, %v1619
    %v1900 = vpack.c.b16 %v1627, %v1620
    %v1901 = vpack.c.b16 %v1628, %v1621
    %v1902 = vpack.c.b16 %v1629, %v1622
    %v1903 = vpack.c.b16 %v1630, %v1623
    %v1904 = vpack.c.b16 %v1638, %v1631
    %v1905 = vpack.c.b16 %v1639, %v1632
    %v1906 = vpack.c.b16 %v1640, %v1633
    %v1907 = vpack.c.b16 %v1641, %v1634
    %v1908 = vpack.c.b16 %v1642, %v1635
    %v1909 = vpack.c.b16 %v1643, %v1636
    %v1910 = vpack.c.b16 %v1644, %v1637
    %v1911 = vpack.c.b16 %v1652, %v1645
    %v1912 = vpack.c.b16 %v1653, %v1646
    %v1913 = vpack.c.b16 %v1654, %v1647
    %v1914 = vpack.c.b16 %v1655, %v1648
    %v1915 = vpack.c.b16 %v1656, %v1649
    %v1916 = vpack.c.b16 %v1657, %v1650
    %v1917 = vpack.c.b16 %v1658, %v1651
    %v1918 = vpack.c.b16 %v1666, %v1659
    %v1919 = vpack.c.b16 %v1667, %v1660
    %v1920 = vpack.c.b16 %v1668, %v1661
    %v1921 = vpack.c.b16 %v1669, %v1662
    %v1922 = vpack.c.b16 %v1670, %v1663
    %v1923 = vpack.c.b16 %v1671, %v1664
    %v1924 = vpack.c.b16 %v1672, %v1665
    %v1925 = vpack.c.b16 %v1680, %v1673
    %v1926 = vpack.c.b16 %v1681, %v1674
    %v1927 = vpack.c.b16 %v1682, %v1675
    %v1928 = vpack.c.b16 %v1683, %v1676
    %v1929 = vpack.c.b16 %v1684, %v1677
    %v1930 = vpack.c.b16 %v1685, %v1678
    %v1931 = vpack.c.b16 %v1686, %v1679
    %v1932 = vpack.c.b16 %v1694, %v1687
    %v1933 = vpack.c.b16 %v1695, %v1688
    %v1934 = vpack.c.b16 %v1696, %v1689
    %v1935 = vpack.c.b16 %v1697, %v1690
    %v1936 = vpack.c.b16 %v1698, %v1691
    %v1937 = vpack.c.b16 %v1699, %v1692
    %v1938 = vpack.c.b16 %v1700, %v1693
    %v1939 = vpack.c.b16 %v1708, %v1701
    %v1940 = vpack.c.b16 %v1709, %v1702
    %v1941 = vpack.c.b16 %v1710, %v1703
    %v1942 = vpack.c.b16 %v1711, %v1704
    %v1943 = vpack.c.b16 %v1712, %v1705
    %v1944 = vpack.c.b16 %v1713, %v1706
    %v1945 = vpack.c.b16 %v1714, %v1707
    %v1946 = vpack.c.b16 %v1722, %v1715
    %v1947 = vpack.c.b16 %v1723, %v1716
    %v1948 = vpack.c.b16 %v1724, %v1717
    %v1949 = vpack.c.b16 %v1725, %v1718
    %v1950 = vpack.c.b16 %v1726, %v1719
    %v1951 = vpack.c.b16 %v1727, %v1720
    %v1952 = vpack.c.b16 %v1728, %v1721
    %2177 = vmatprep.subr.bf16.mxu0 %v1779
    %2178 = vmatpush1.bf16.msra.mxu0 %v1778
    %2179 = vmatprep.subr.bf16.mxu0 %v1772
    %2180 = vmatpush1.bf16.msra.mxu0 %v1771
    %2181 = vmatprep.subr.bf16.mxu0 %v1765
    %2182 = vmatpush1.bf16.msra.mxu0 %v1764
    %2183 = vmatprep.subr.bf16.mxu0 %v1758
    %2184 = vmatpush1.bf16.msra.mxu0 %v1757
    %2185 = vmatprep.subr.bf16.mxu0 %v1751
    %2186 = vmatpush1.bf16.msra.mxu0 %v1750
    %2187 = vmatprep.subr.bf16.mxu0 %v1744
    %2188 = vmatpush1.bf16.msra.mxu0 %v1743
    %2189 = vmatprep.subr.bf16.mxu0 %v1737
    %2190 = vmatpush1.bf16.msra.mxu0 %v1736
    %2191 = vmatprep.subr.bf16.mxu0 %v1730
    %2192 = vmatpush1.bf16.msra.mxu0 %v1729
    %2193 = vmatprep.subr.bf16.mxu0 %v1835
    %2194 = vmatpush2.bf16.msra.mxu0 %v1834
    %2195 = vmatprep.subr.bf16.mxu0 %v1828
    %2196 = vmatpush2.bf16.msra.mxu0 %v1827
    %2197 = vmatprep.subr.bf16.mxu0 %v1821
    %2198 = vmatpush2.bf16.msra.mxu0 %v1820
    %2199 = vmatprep.subr.bf16.mxu0 %v1814
    %2200 = vmatpush2.bf16.msra.mxu0 %v1813
    %2201 = vmatprep.subr.bf16.mxu0 %v1807
    %2202 = vmatpush2.bf16.msra.mxu0 %v1806
    %2203 = vmatprep.subr.bf16.mxu0 %v1800
    %2204 = vmatpush2.bf16.msra.mxu0 %v1799
    %2205 = vmatprep.subr.bf16.mxu0 %v1793
    %2206 = vmatpush2.bf16.msra.mxu0 %v1792
    %2207 = vmatprep.subr.bf16.mxu0 %v1786
    %2208 = vmatpush2.bf16.msra.mxu0 %v1785
    %2209 = vmatprep.mubr.bf16.mxu0 %v766
    %2210 = vmatmul.mubr.bf16.gmra.mxu0 %v765
    %v2211 = vpop.f32.mrf.mxu0
    %v2212 = vadd.f32 0.0, %v2211
    %v2213 = vpop.f32.mrf.mxu0
    %v2214 = vadd.f32 0.0, %v2213
    %v2215 = vpop.f32.mrf.mxu0
    %v2216 = vpop.f32.mrf.mxu0
    %2217 = vdwg.mxu0
    %2218 = vmatprep.subr.bf16.mxu0 %v1891
    %2219 = vmatpush1.bf16.msra.mxu0 %v1890
    %2220 = vmatprep.subr.bf16.mxu0 %v1884
    %2221 = vmatpush1.bf16.msra.mxu0 %v1883
    %2222 = vmatprep.subr.bf16.mxu0 %v1877
    %2223 = vmatpush1.bf16.msra.mxu0 %v1876
    %2224 = vmatprep.subr.bf16.mxu0 %v1870
    %2225 = vmatpush1.bf16.msra.mxu0 %v1869
    %2226 = vmatprep.subr.bf16.mxu0 %v1863
    %2227 = vmatpush1.bf16.msra.mxu0 %v1862
    %2228 = vmatprep.subr.bf16.mxu0 %v1856
    %2229 = vmatpush1.bf16.msra.mxu0 %v1855
    %2230 = vmatprep.subr.bf16.mxu0 %v1849
    %2231 = vmatpush1.bf16.msra.mxu0 %v1848
    %2232 = vmatprep.subr.bf16.mxu0 %v1842
    %2233 = vmatpush1.bf16.msra.mxu0 %v1841
    %2234 = vmatprep.subr.bf16.mxu0 %v1947
    %2235 = vmatpush2.bf16.msra.mxu0 %v1946
    %2236 = vmatprep.subr.bf16.mxu0 %v1940
    %2237 = vmatpush2.bf16.msra.mxu0 %v1939
    %2238 = vmatprep.subr.bf16.mxu0 %v1933
    %2239 = vmatpush2.bf16.msra.mxu0 %v1932
    %2240 = vmatprep.subr.bf16.mxu0 %v1926
    %2241 = vmatpush2.bf16.msra.mxu0 %v1925
    %2242 = vmatprep.subr.bf16.mxu0 %v1919
    %2243 = vmatpush2.bf16.msra.mxu0 %v1918
    %2244 = vmatprep.subr.bf16.mxu0 %v1912
    %2245 = vmatpush2.bf16.msra.mxu0 %v1911
    %2246 = vmatprep.subr.bf16.mxu0 %v1905
    %2247 = vmatpush2.bf16.msra.mxu0 %v1904
    %2248 = vmatprep.subr.bf16.mxu0 %v1898
    %2249 = vmatpush2.bf16.msra.mxu0 %v1897
    %2250 = vmatprep.mubr.bf16.mxu0 %v768
    %2251 = vmatmul.mubr.bf16.gmra.mxu0 %v767
    %v2252 = vpop.f32.mrf.mxu0
    %v2253 = vadd.f32 %v2212, %v2252
    %v2254 = vpop.f32.mrf.mxu0
    %v2255 = vadd.f32 %v2214, %v2254
    %v2256 = vpop.f32.mrf.mxu0
    %v2257 = vpop.f32.mrf.mxu0
    %2258 = vdwg.mxu0
    %2259 = vmatprep.subr.bf16.mxu0 %v1781
    %2260 = vmatpush1.bf16.msra.mxu0 %v1780
    %2261 = vmatprep.subr.bf16.mxu0 %v1774
    %2262 = vmatpush1.bf16.msra.mxu0 %v1773
    %2263 = vmatprep.subr.bf16.mxu0 %v1767
    %2264 = vmatpush1.bf16.msra.mxu0 %v1766
    %2265 = vmatprep.subr.bf16.mxu0 %v1760
    %2266 = vmatpush1.bf16.msra.mxu0 %v1759
    %2267 = vmatprep.subr.bf16.mxu0 %v1753
    %2268 = vmatpush1.bf16.msra.mxu0 %v1752
    %2269 = vmatprep.subr.bf16.mxu0 %v1746
    %2270 = vmatpush1.bf16.msra.mxu0 %v1745
    %2271 = vmatprep.subr.bf16.mxu0 %v1739
    %2272 = vmatpush1.bf16.msra.mxu0 %v1738
    %2273 = vmatprep.subr.bf16.mxu0 %v1732
    %2274 = vmatpush1.bf16.msra.mxu0 %v1731
    %2275 = vmatprep.subr.bf16.mxu0 %v1837
    %2276 = vmatpush2.bf16.msra.mxu0 %v1836
    %2277 = vmatprep.subr.bf16.mxu0 %v1830
    %2278 = vmatpush2.bf16.msra.mxu0 %v1829
    %2279 = vmatprep.subr.bf16.mxu0 %v1823
    %2280 = vmatpush2.bf16.msra.mxu0 %v1822
    %2281 = vmatprep.subr.bf16.mxu0 %v1816
    %2282 = vmatpush2.bf16.msra.mxu0 %v1815
    %2283 = vmatprep.subr.bf16.mxu0 %v1809
    %2284 = vmatpush2.bf16.msra.mxu0 %v1808
    %2285 = vmatprep.subr.bf16.mxu0 %v1802
    %2286 = vmatpush2.bf16.msra.mxu0 %v1801
    %2287 = vmatprep.subr.bf16.mxu0 %v1795
    %2288 = vmatpush2.bf16.msra.mxu0 %v1794
    %2289 = vmatprep.subr.bf16.mxu0 %v1788
    %2290 = vmatpush2.bf16.msra.mxu0 %v1787
    %2291 = vmatprep.mubr.bf16.mxu0 %v766
    %2292 = vmatmul.mubr.bf16.gmra.mxu0 %v765
    %v2293 = vpop.f32.mrf.mxu0
    %v2294 = vadd.f32 0.0, %v2293
    %v2295 = vpop.f32.mrf.mxu0
    %v2296 = vadd.f32 0.0, %v2295
    %v2297 = vpop.f32.mrf.mxu0
    %v2298 = vpop.f32.mrf.mxu0
    %2299 = vdwg.mxu0
    %2300 = vmatprep.subr.bf16.mxu0 %v1893
    %2301 = vmatpush1.bf16.msra.mxu0 %v1892
    %2302 = vmatprep.subr.bf16.mxu0 %v1886
    %2303 = vmatpush1.bf16.msra.mxu0 %v1885
    %2304 = vmatprep.subr.bf16.mxu0 %v1879
    %2305 = vmatpush1.bf16.msra.mxu0 %v1878
    %2306 = vmatprep.subr.bf16.mxu0 %v1872
    %2307 = vmatpush1.bf16.msra.mxu0 %v1871
    %2308 = vmatprep.subr.bf16.mxu0 %v1865
    %2309 = vmatpush1.bf16.msra.mxu0 %v1864
    %2310 = vmatprep.subr.bf16.mxu0 %v1858
    %2311 = vmatpush1.bf16.msra.mxu0 %v1857
    %2312 = vmatprep.subr.bf16.mxu0 %v1851
    %2313 = vmatpush1.bf16.msra.mxu0 %v1850
    %2314 = vmatprep.subr.bf16.mxu0 %v1844
    %2315 = vmatpush1.bf16.msra.mxu0 %v1843
    %2316 = vmatprep.subr.bf16.mxu0 %v1949
    %2317 = vmatpush2.bf16.msra.mxu0 %v1948
    %2318 = vmatprep.subr.bf16.mxu0 %v1942
    %2319 = vmatpush2.bf16.msra.mxu0 %v1941
    %2320 = vmatprep.subr.bf16.mxu0 %v1935
    %2321 = vmatpush2.bf16.msra.mxu0 %v1934
    %2322 = vmatprep.subr.bf16.mxu0 %v1928
    %2323 = vmatpush2.bf16.msra.mxu0 %v1927
    %2324 = vmatprep.subr.bf16.mxu0 %v1921
    %2325 = vmatpush2.bf16.msra.mxu0 %v1920
    %2326 = vmatprep.subr.bf16.mxu0 %v1914
    %2327 = vmatpush2.bf16.msra.mxu0 %v1913
    %2328 = vmatprep.subr.bf16.mxu0 %v1907
    %2329 = vmatpush2.bf16.msra.mxu0 %v1906
    %2330 = vmatprep.subr.bf16.mxu0 %v1900
    %2331 = vmatpush2.bf16.msra.mxu0 %v1899
    %2332 = vmatprep.mubr.bf16.mxu0 %v768
    %2333 = vmatmul.mubr.bf16.gmra.mxu0 %v767
    %v2334 = vpop.f32.mrf.mxu0
    %v2335 = vadd.f32 %v2294, %v2334
    %v2336 = vpop.f32.mrf.mxu0
    %v2337 = vadd.f32 %v2296, %v2336
    %v2338 = vpop.f32.mrf.mxu0
    %v2339 = vpop.f32.mrf.mxu0
    %2340 = vdwg.mxu0
    %2341 = vmatprep.subr.bf16.mxu0 %v1783
    %2342 = vmatpush1.bf16.msra.mxu0 %v1782
    %2343 = vmatprep.subr.bf16.mxu0 %v1776
    %2344 = vmatpush1.bf16.msra.mxu0 %v1775
    %2345 = vmatprep.subr.bf16.mxu0 %v1769
    %2346 = vmatpush1.bf16.msra.mxu0 %v1768
    %2347 = vmatprep.subr.bf16.mxu0 %v1762
    %2348 = vmatpush1.bf16.msra.mxu0 %v1761
    %2349 = vmatprep.subr.bf16.mxu0 %v1755
    %2350 = vmatpush1.bf16.msra.mxu0 %v1754
    %2351 = vmatprep.subr.bf16.mxu0 %v1748
    %2352 = vmatpush1.bf16.msra.mxu0 %v1747
    %2353 = vmatprep.subr.bf16.mxu0 %v1741
    %2354 = vmatpush1.bf16.msra.mxu0 %v1740
    %2355 = vmatprep.subr.bf16.mxu0 %v1734
    %2356 = vmatpush1.bf16.msra.mxu0 %v1733
    %2357 = vmatprep.subr.bf16.mxu0 %v1839
    %2358 = vmatpush2.bf16.msra.mxu0 %v1838
    %2359 = vmatprep.subr.bf16.mxu0 %v1832
    %2360 = vmatpush2.bf16.msra.mxu0 %v1831
    %2361 = vmatprep.subr.bf16.mxu0 %v1825
    %2362 = vmatpush2.bf16.msra.mxu0 %v1824
    %2363 = vmatprep.subr.bf16.mxu0 %v1818
    %2364 = vmatpush2.bf16.msra.mxu0 %v1817
    %2365 = vmatprep.subr.bf16.mxu0 %v1811
    %2366 = vmatpush2.bf16.msra.mxu0 %v1810
    %2367 = vmatprep.subr.bf16.mxu0 %v1804
    %2368 = vmatpush2.bf16.msra.mxu0 %v1803
    %2369 = vmatprep.subr.bf16.mxu0 %v1797
    %2370 = vmatpush2.bf16.msra.mxu0 %v1796
    %2371 = vmatprep.subr.bf16.mxu0 %v1790
    %2372 = vmatpush2.bf16.msra.mxu0 %v1789
    %2373 = vmatprep.mubr.bf16.mxu0 %v766
    %2374 = vmatmul.mubr.bf16.gmra.mxu0 %v765
    %v2375 = vpop.f32.mrf.mxu0
    %v2376 = vadd.f32 0.0, %v2375
    %v2377 = vpop.f32.mrf.mxu0
    %v2378 = vadd.f32 0.0, %v2377
    %v2379 = vpop.f32.mrf.mxu0
    %v2380 = vpop.f32.mrf.mxu0
    %2381 = vdwg.mxu0
    %2382 = vmatprep.subr.bf16.mxu0 %v1895
    %2383 = vmatpush1.bf16.msra.mxu0 %v1894
    %2384 = vmatprep.subr.bf16.mxu0 %v1888
    %2385 = vmatpush1.bf16.msra.mxu0 %v1887
    %2386 = vmatprep.subr.bf16.mxu0 %v1881
    %2387 = vmatpush1.bf16.msra.mxu0 %v1880
    %2388 = vmatprep.subr.bf16.mxu0 %v1874
    %2389 = vmatpush1.bf16.msra.mxu0 %v1873
    %2390 = vmatprep.subr.bf16.mxu0 %v1867
    %2391 = vmatpush1.bf16.msra.mxu0 %v1866
    %2392 = vmatprep.subr.bf16.mxu0 %v1860
    %2393 = vmatpush1.bf16.msra.mxu0 %v1859
    %2394 = vmatprep.subr.bf16.mxu0 %v1853
    %2395 = vmatpush1.bf16.msra.mxu0 %v1852
    %2396 = vmatprep.subr.bf16.mxu0 %v1846
    %2397 = vmatpush1.bf16.msra.mxu0 %v1845
    %2398 = vmatprep.subr.bf16.mxu0 %v1951
    %2399 = vmatpush2.bf16.msra.mxu0 %v1950
    %2400 = vmatprep.subr.bf16.mxu0 %v1944
    %2401 = vmatpush2.bf16.msra.mxu0 %v1943
    %2402 = vmatprep.subr.bf16.mxu0 %v1937
    %2403 = vmatpush2.bf16.msra.mxu0 %v1936
    %2404 = vmatprep.subr.bf16.mxu0 %v1930
    %2405 = vmatpush2.bf16.msra.mxu0 %v1929
    %2406 = vmatprep.subr.bf16.mxu0 %v1923
    %2407 = vmatpush2.bf16.msra.mxu0 %v1922
    %2408 = vmatprep.subr.bf16.mxu0 %v1916
    %2409 = vmatpush2.bf16.msra.mxu0 %v1915
    %2410 = vmatprep.subr.bf16.mxu0 %v1909
    %2411 = vmatpush2.bf16.msra.mxu0 %v1908
    %2412 = vmatprep.subr.bf16.mxu0 %v1902
    %2413 = vmatpush2.bf16.msra.mxu0 %v1901
    %2414 = vmatprep.mubr.bf16.mxu0 %v768
    %2415 = vmatmul.mubr.bf16.gmra.mxu0 %v767
    %v2416 = vpop.f32.mrf.mxu0
    %v2417 = vadd.f32 %v2376, %v2416
    %v2418 = vpop.f32.mrf.mxu0
    %v2419 = vadd.f32 %v2378, %v2418
    %v2420 = vpop.f32.mrf.mxu0
    %v2421 = vpop.f32.mrf.mxu0
    %2422 = vdwg.mxu0
    %2423 = vmatprep.subr.bf16.mxu0 0
    %2424 = vmatpush1.bf16.msra.mxu0 %v1784
    %2425 = vmatprep.subr.bf16.mxu0 0
    %2426 = vmatpush1.bf16.msra.mxu0 %v1777
    %2427 = vmatprep.subr.bf16.mxu0 0
    %2428 = vmatpush1.bf16.msra.mxu0 %v1770
    %2429 = vmatprep.subr.bf16.mxu0 0
    %2430 = vmatpush1.bf16.msra.mxu0 %v1763
    %2431 = vmatprep.subr.bf16.mxu0 0
    %2432 = vmatpush1.bf16.msra.mxu0 %v1756
    %2433 = vmatprep.subr.bf16.mxu0 0
    %2434 = vmatpush1.bf16.msra.mxu0 %v1749
    %2435 = vmatprep.subr.bf16.mxu0 0
    %2436 = vmatpush1.bf16.msra.mxu0 %v1742
    %2437 = vmatprep.subr.bf16.mxu0 0
    %2438 = vmatpush1.bf16.msra.mxu0 %v1735
    %2439 = vmatprep.subr.bf16.mxu0 0
    %2440 = vmatpush2.bf16.msra.mxu0 %v1840
    %2441 = vmatprep.subr.bf16.mxu0 0
    %2442 = vmatpush2.bf16.msra.mxu0 %v1833
    %2443 = vmatprep.subr.bf16.mxu0 0
    %2444 = vmatpush2.bf16.msra.mxu0 %v1826
    %2445 = vmatprep.subr.bf16.mxu0 0
    %2446 = vmatpush2.bf16.msra.mxu0 %v1819
    %2447 = vmatprep.subr.bf16.mxu0 0
    %2448 = vmatpush2.bf16.msra.mxu0 %v1812
    %2449 = vmatprep.subr.bf16.mxu0 0
    %2450 = vmatpush2.bf16.msra.mxu0 %v1805
    %2451 = vmatprep.subr.bf16.mxu0 0
    %2452 = vmatpush2.bf16.msra.mxu0 %v1798
    %2453 = vmatprep.subr.bf16.mxu0 0
    %2454 = vmatpush2.bf16.msra.mxu0 %v1791
    %2455 = vmatprep.mubr.bf16.mxu0 %v766
    %2456 = vmatmul.mubr.bf16.gmra.mxu0 %v765
    %v2457 = vpop.f32.mrf.mxu0
    %v2458 = vadd.f32 0.0, %v2457
    %v2459 = vpop.f32.mrf.mxu0
    %v2460 = vpop.f32.mrf.mxu0
    %v2461 = vpop.f32.mrf.mxu0
    %2462 = vdwg.mxu0
    %2463 = vmatprep.subr.bf16.mxu0 0
    %2464 = vmatpush1.bf16.msra.mxu0 %v1896
    %2465 = vmatprep.subr.bf16.mxu0 0
    %2466 = vmatpush1.bf16.msra.mxu0 %v1889
    %2467 = vmatprep.subr.bf16.mxu0 0
    %2468 = vmatpush1.bf16.msra.mxu0 %v1882
    %2469 = vmatprep.subr.bf16.mxu0 0
    %2470 = vmatpush1.bf16.msra.mxu0 %v1875
    %2471 = vmatprep.subr.bf16.mxu0 0
    %2472 = vmatpush1.bf16.msra.mxu0 %v1868
    %2473 = vmatprep.subr.bf16.mxu0 0
    %2474 = vmatpush1.bf16.msra.mxu0 %v1861
    %2475 = vmatprep.subr.bf16.mxu0 0
    %2476 = vmatpush1.bf16.msra.mxu0 %v1854
    %2477 = vmatprep.subr.bf16.mxu0 0
    %2478 = vmatpush1.bf16.msra.mxu0 %v1847
    %2479 = vmatprep.subr.bf16.mxu0 0
    %2480 = vmatpush2.bf16.msra.mxu0 %v1952
    %2481 = vmatprep.subr.bf16.mxu0 0
    %2482 = vmatpush2.bf16.msra.mxu0 %v1945
    %2483 = vmatprep.subr.bf16.mxu0 0
    %2484 = vmatpush2.bf16.msra.mxu0 %v1938
    %2485 = vmatprep.subr.bf16.mxu0 0
    %2486 = vmatpush2.bf16.msra.mxu0 %v1931
    %2487 = vmatprep.subr.bf16.mxu0 0
    %2488 = vmatpush2.bf16.msra.mxu0 %v1924
    %2489 = vmatprep.subr.bf16.mxu0 0
    %2490 = vmatpush2.bf16.msra.mxu0 %v1917
    %2491 = vmatprep.subr.bf16.mxu0 0
    %2492 = vmatpush2.bf16.msra.mxu0 %v1910
    %2493 = vmatprep.subr.bf16.mxu0 0
    %2494 = vmatpush2.bf16.msra.mxu0 %v1903
    %2495 = vmatprep.mubr.bf16.mxu0 %v768
    %2496 = vmatmul.mubr.bf16.gmra.mxu0 %v767
    %v2497 = vpop.f32.mrf.mxu0
    %v2498 = vadd.f32 %v2458, %v2497
    %v2499 = vpop.f32.mrf.mxu0
    %v2500 = vpop.f32.mrf.mxu0
    %v2501 = vpop.f32.mrf.mxu0
    %2502 = vdwg.mxu0
    %v2503 = vmul.f32 %v2253, 0.5
    %v2504 = vmul.f32 %v2255, 0.5
    %v2505 = vmul.f32 %v2335, 0.5
    %v2506 = vmul.f32 %v2337, 0.5
    %v2507 = vmul.f32 %v2417, 0.5
    %v2508 = vmul.f32 %v2419, 0.5
    %v2509 = vmul.f32 %v2498, 0.5
    %v2510 = vtanh.pop %v2503
    %v2511 = vtanh.pop %v2504
    %v2512 = vtanh.pop %v2505
    %v2513 = vtanh.pop %v2506
    %v2514 = vtanh.pop %v2507
    %v2515 = vtanh.pop %v2508
    %v2516 = vtanh.pop %v2509
    %v2517 = vadd.f32 %v2510, 1.0
    %v2518 = vadd.f32 %v2511, 1.0
    %v2519 = vadd.f32 %v2512, 1.0
    %v2520 = vadd.f32 %v2513, 1.0
    %v2521 = vadd.f32 %v2514, 1.0
    %v2522 = vadd.f32 %v2515, 1.0
    %v2523 = vadd.f32 %v2516, 1.0
    %v2524 = vmul.f32 %v2517, 0.5
    %v2525 = vmul.f32 %v2518, 0.5
    %v2526 = vmul.f32 %v2519, 0.5
    %v2527 = vmul.f32 %v2520, 0.5
    %v2528 = vmul.f32 %v2521, 0.5
    %v2529 = vmul.f32 %v2522, 0.5
    %v2530 = vmul.f32 %v2523, 0.5
    %2531 = vst [vmem:[#allocation2] sm:$0xff] %v2524
    %2532 = vst [vmem:[#allocation2 + $0x8] sm:$0xff] %v2525
    %2533 = vst [vmem:[#allocation2 + $0x10] sm:$0xff] %v2526
    %2534 = vst [vmem:[#allocation2 + $0x18] sm:$0xff] %v2527
    %2535 = vst [vmem:[#allocation2 + $0x20] sm:$0xff] %v2528
    %2536 = vst [vmem:[#allocation2 + $0x28] sm:$0xff] %v2529
    %vm2537 = vcmask 130048
    %2538 = vst.msk [vmem:[#allocation2 + $0x30] sm:$0xff] %vm2537, %v2530
    // Predicated region
    $region30: #{tpu_custom_call.1} parent=1 // pred_check
      _
    $region31: #{tpu_custom_call.1} parent=1 // pred_check_branch
      %2540 = sbr.rel (0) target = $region33
    $region32: #{tpu_custom_call.1} parent=1 // pred_region
      %s2542 = ssub.s32 896, 896
      %2543 = vsyncadd [#allocation3], %s2542
      %s2545 = sshll.u32 [#allocation2], 4
      %s2546 = int_to_ptr.vmem [resolvable:$true] %s2545
      %2548 = dma.vmem_to_hbm [thread:$0]  %s2546, 896, %s7, [#allocation3]
    $region33: #{tpu_custom_call.1} parent=1 // pred_fallthru
      _
    // Predicated region
    $region34: #{tpu_custom_call.1} parent=1 // pred_check
      _
    $region35: #{tpu_custom_call.1} parent=1 // pred_check_branch
      %2550 = sbr.rel (0) target = $region37
    $region36: #{tpu_custom_call.1} parent=1 // pred_region
      %2551 = dma.done [#allocation3], 896
    $region37: #{tpu_custom_call.1} parent=1 // pred_fallthru
      _
    %2552 = vsyncpa [#allocation3], 1

</llo_original>
